<compile_context>
chip_gen: v7x
topology: tpu7x:2x2x1
jax: 0.10.0
libtpu: 0.0.40
codegen_flags: <defaults>
</compile_context>

<pallas_src>
import math
from functools import partial

import jax
import jax.numpy as jnp
from jax import lax
from jax.experimental import pallas as pl
from jax.experimental.pallas import tpu as pltpu

BN_EPS = 1e-5
_INV_SQRT2 = 1.0 / math.sqrt(2.0)


def _vmem_capacity_bytes():
    """Generation-aware VMEM size (v7x: 64 MiB, v5e/v6e: 128 MiB)."""
    try:
        info = pltpu.get_tpu_info()
        for name in ("vmem_capacity_bytes", "vmem_bytes", "vmem_size_bytes"):
            v = getattr(info, name, None)
            if v:
                return int(v)
    except Exception:
        pass
    return 64 * 1024 * 1024          # conservative default (v7x size)


# --------------------------------------------------------------------------------------
# Shared per-tile conv (+ exact f32 residual): ONE MXU dot from a VMEM im2col patch.
# --------------------------------------------------------------------------------------
def _make_conv_tile(*, K, pad, tile_Ho, Wo, Cin, add, mxu_dtype):
    rows = tile_Ho * Wo

    def conv_tile(main_ref, halo_ref, w_ref, slab_ref, patch_ref):
        # main_ref : [1, tile_Ho, Wp, Cin] f32   (non-overlapping padded-NHWC rows)
        # halo_ref : [1, K-1,     Wp, Cin] f32   (the K-1 rows just below the block)
        # w_ref    : [K*K*Cin, Cout]             (mxu_dtype)
        # slab_ref : VMEM scratch [tile_Ho+K-1, Wp, Cin] f32
        # patch_ref: VMEM scratch [rows, K*K*Cin] f32
        # Stitch the halo-contiguous slab in VMEM (cheap VMEM->VMEM copies).
        slab_ref[0:tile_Ho, :, :] = main_ref[0]
        if K > 1:
            slab_ref[tile_Ho:tile_Ho + K - 1, :, :] = halo_ref[0]

        # Pack the K*K tap windows once into the im2col patch matrix.
        for kh in range(K):
            for kw in range(K):
                t = kh * K + kw
                tap = slab_ref[kh:kh + tile_Ho, kw:kw + Wo, :].reshape(rows, Cin)
                patch_ref[:, t * Cin:(t + 1) * Cin] = tap

        # ONE MXU dot per tile (bf16 operands by default, f32 accumulation).
        acc = jnp.dot(patch_ref[...].astype(mxu_dtype), w_ref[...],
                      preferred_element_type=jnp.float32)

        if add:
            # Exact-f32 shortcut: plain VPU add of the centre tap (no identity matmul).
            res = slab_ref[pad:pad + tile_Ho, pad:pad + Wo, :].reshape(rows, Cin)
            acc = acc + res
        return acc

    return conv_tile


# --------------------------------------------------------------------------------------
# Pass 1: conv -> per-tile mean-shifted BN partials (no HBM conv intermediate).
# --------------------------------------------------------------------------------------
def _stats_kernel(main_ref, halo_ref, w_ref, stats_ref, slab_ref, patch_ref, *,
                  conv_tile, rows):
    acc = conv_tile(main_ref, halo_ref, w_ref, slab_ref, patch_ref)   # [rows, Cout] f32
    s1 = jnp.sum(acc, axis=0, keepdims=True)                          # [1, Cout]
    d = acc - s1 * (1.0 / rows)
    m2 = jnp.sum(d * d, axis=0, keepdims=True)                        # [1, Cout]
    stats_ref[0, 0:1, :] = s1                                         # no concat
    stats_ref[0, 1:2, :] = m2


# --------------------------------------------------------------------------------------
# Pass 2: conv recompute -> folded BN affine -> exact erf-GELU -> output.
# --------------------------------------------------------------------------------------
def _apply_kernel(main_ref, halo_ref, w_ref, ss_ref, o_ref, slab_ref, patch_ref, *,
                  conv_tile):
    acc = conv_tile(main_ref, halo_ref, w_ref, slab_ref, patch_ref)   # [rows, Cout] f32
    yhat = acc * ss_ref[0:1, :] + ss_ref[1:2, :]                      # y*scale + shift
    o_ref[0] = 0.5 * yhat * (1.0 + lax.erf(yhat * _INV_SQRT2))        # exact GELU


# --------------------------------------------------------------------------------------
# Wrapper
# --------------------------------------------------------------------------------------
def gelu_conv(x_nchw, w_oihw, gamma, beta, *, ksize, stride=1, shortcut=False,
              mxu_dtype=jnp.bfloat16, target_rows=2048):
    """x_nchw: [N, Cin, H, W] f32; w_oihw: [Cout, Cin, K, K]; gamma/beta: [Cout]."""
    N, Cin, H, W = x_nchw.shape
    Cout, Cin_w, Kh, Kw = w_oihw.shape
    K = ksize
    assert Cin_w == Cin and Kh == K and Kw == K
    assert K % 2 == 1, "odd kernel size expected for 'same' padding"
    assert stride == 1, "TODO(synk): stride > 1 not implemented in the Pallas path"
    pad = (K - 1) // 2
    Ho, Wo = H, W
    Wp = W + 2 * pad
    add = bool(shortcut) and (Cin == Cout)
    f32 = jnp.float32
    KKC = K * K * Cin
    w_isz = jnp.dtype(mxu_dtype).itemsize
    Mtot = N * Ho * Wo

    # ---- generation-aware VMEM budget ----
    vmem_cap = _vmem_capacity_bytes()
    vmem_limit = int(min(max(vmem_cap * 3 // 4, 32 * 1024 * 1024), 100 * 1024 * 1024))
    tile_budget = vmem_limit // 2

    def tile_bytes(tho):
        rows_ = tho * Wo
        dbl = 2 * (tho * Wp * Cin * 4 + max(K - 1, 1) * Wp * Cin * 4
                   + KKC * Cout * w_isz + rows_ * Cout * 4 + 4 * Cout * 4)
        scratch = (tho + K - 1) * Wp * Cin * 4 + rows_ * KKC * 4
        temps = 6 * rows_ * Cout * 4
        return dbl + scratch + temps

    # tile_Ho must divide Ho and be a multiple of 8 (or the full Ho): keeps every HBM
    # block's trailing dims legal with the TRUE (unpadded) channel count.
    legal = [d for d in range(1, Ho + 1) if Ho % d == 0 and (d % 8 == 0 or d == Ho)]
    fitting = [d for d in legal if tile_bytes(d) <= tile_budget] or [min(legal)]
    pref = [d for d in fitting if d * Wo <= target_rows]
    tile_Ho = max(pref) if pref else min(fitting)
    # v7x megacore: keep >= 4 (even) tiles so both TensorCores get balanced work.
    while N * (Ho // tile_Ho) < 4:
        smaller = [d for d in fitting if d < tile_Ho]
        if not smaller:
            break
        tile_Ho = max(smaller)

    num_ht = Ho // tile_Ho
    rows = tile_Ho * Wo
    tile_Hs = tile_Ho + K - 1
    num_tiles = N * num_ht
    hrows = max(K - 1, 1)

    # ---- layout glue: single padded NHWC copy + tiny halo strips (no slab stacking) ----
    x_nhwc = jnp.transpose(x_nchw.astype(f32), (0, 2, 3, 1))            # [N, H, W, Cin]
    x_p = jnp.pad(x_nhwc, ((0, 0), (pad, pad), (pad, pad), (0, 0)))     # [N, Hp, Wp, Cin]
    if K > 1:
        halo = jnp.stack([x_p[:, (ht + 1) * tile_Ho:(ht + 1) * tile_Ho + (K - 1)]
                          for ht in range(num_ht)], axis=1)
        halo = halo.reshape(num_tiles, K - 1, Wp, Cin)
    else:
        halo = jnp.zeros((num_tiles, 1, Wp, Cin), f32)
    # weight [Cout, Cin, K, K] -> [K*K*Cin, Cout] (tap-major rows, matches the patch)
    w2d = jnp.transpose(w_oihw.astype(f32), (2, 3, 1, 0)).reshape(KKC, Cout)
    w2d = w2d.astype(mxu_dtype)

    conv_tile = _make_conv_tile(K=K, pad=pad, tile_Ho=tile_Ho, Wo=Wo, Cin=Cin,
                                add=add, mxu_dtype=mxu_dtype)
    cparams = pltpu.CompilerParams(
        dimension_semantics=("parallel", "parallel"),
        vmem_limit_bytes=vmem_limit)
    scratch_shapes = [pltpu.VMEM((tile_Hs, Wp, Cin), f32),
                      pltpu.VMEM((rows, KKC), f32)]
    in_specs_conv = [
        pl.BlockSpec((1, tile_Ho, Wp, Cin), lambda n, ht: (n, ht, 0, 0)),
        pl.BlockSpec((1, hrows, Wp, Cin), lambda n, ht: (n * num_ht + ht, 0, 0, 0)),
        # TODO(synk): pipeline_mode=pl.Buffered(1) would single-buffer this constant
        #             weight block and free VMEM for larger tiles on v7x.
        pl.BlockSpec((KKC, Cout), lambda n, ht: (0, 0)),
    ]
    conv_flops = 2 * Mtot * KKC * Cout + (Mtot * Cout if add else 0)
    in_bytes = x_p.size * 4 + halo.size * 4 + KKC * Cout * w_isz

    # ------------------------------- pass 1: BN partials -------------------------------
    stats = pl.pallas_call(
        partial(_stats_kernel, conv_tile=conv_tile, rows=rows),
        grid=(N, num_ht),
        in_specs=in_specs_conv,
        out_specs=pl.BlockSpec((1, 2, Cout), lambda n, ht: (n * num_ht + ht, 0, 0)),
        out_shape=jax.ShapeDtypeStruct((num_tiles, 2, Cout), f32),
        scratch_shapes=scratch_shapes,
        compiler_params=cparams,
        cost_estimate=pl.CostEstimate(flops=conv_flops + 4 * Mtot * Cout,
                                      transcendentals=0,
                                      bytes_accessed=in_bytes + num_tiles * 2 * Cout * 4),
    )(x_p, halo, w2d)

    # ---- tiny glue: Chan-merge the per-tile partials, fold with gamma/beta ----
    sums = stats[:, 0, :]                                  # [T, Cout]
    m2s = stats[:, 1, :]
    mu = jnp.sum(sums, axis=0) / Mtot
    mean_t = sums / rows
    var = (jnp.sum(m2s, axis=0) + rows * jnp.sum((mean_t - mu) ** 2, axis=0)) / Mtot
    scale = gamma.astype(f32) * lax.rsqrt(var + BN_EPS)
    shift = beta.astype(f32) - mu * scale
    ss = jnp.stack([scale, shift], axis=0)                 # [2, Cout] f32

    # ------------------------- pass 2: conv -> BN -> GELU -> out -------------------------
    out = pl.pallas_call(
        partial(_apply_kernel, conv_tile=conv_tile),
        grid=(N, num_ht),
        in_specs=in_specs_conv + [pl.BlockSpec((2, Cout), lambda n, ht: (0, 0))],
        out_specs=pl.BlockSpec((1, rows, Cout), lambda n, ht: (n * num_ht + ht, 0, 0)),
        out_shape=jax.ShapeDtypeStruct((num_tiles, rows, Cout), f32),
        scratch_shapes=scratch_shapes,
        compiler_params=cparams,
        cost_estimate=pl.CostEstimate(flops=conv_flops + 10 * Mtot * Cout,
                                      transcendentals=Mtot * Cout,
                                      bytes_accessed=in_bytes + Mtot * Cout * 4
                                      + 2 * Cout * 4),
    )(x_p, halo, w2d, ss)

    # contiguous reshape (free) back to NHWC, then to the module's NCHW contract
    out_nhwc = out.reshape(N, Ho, Wo, Cout)
    return jnp.transpose(out_nhwc, (0, 3, 1, 2))


# --------------------------------------------------------------------------------------
# Pure-JAX reference of the PyTorch forward (train-mode BN, exact erf GELU)
# --------------------------------------------------------------------------------------
def _reference(x_nchw, w_oihw, gamma, beta, *, ksize, stride, shortcut):
    pad = (ksize - 1) // 2
    y = lax.conv_general_dilated(
        x_nchw, w_oihw, (stride, stride), [(pad, pad), (pad, pad)],
        dimension_numbers=("NCHW", "OIHW", "NCHW"))
    if shortcut and x_nchw.shape[1] == w_oihw.shape[0]:
        y = x_nchw + y
    mu = jnp.mean(y, axis=(0, 2, 3), keepdims=True)
    var = jnp.mean((y - mu) ** 2, axis=(0, 2, 3), keepdims=True)
    y = (y - mu) * lax.rsqrt(var + BN_EPS)
    y = y * gamma.reshape(1, -1, 1, 1) + beta.reshape(1, -1, 1, 1)
    return 0.5 * y * (1.0 + lax.erf(y / math.sqrt(2.0)))


if __name__ == "__main__":
    # GELUConv(in_channels=4, out_channels=4, ksize=3, stride=1, shortcut=True,
    #          groups=1, bias=False)
    N, Cin, Cout, H, W = 2, 4, 4, 16, 16
    K, STRIDE, SHORTCUT = 3, 1, True

    key = jax.random.PRNGKey(0)
    kx, kw, kg, kb = jax.random.split(key, 4)
    x = jax.random.normal(kx, (N, Cin, H, W), dtype=jnp.float32)
    w = jax.random.normal(kw, (Cout, Cin, K, K), dtype=jnp.float32) * 0.1
    gamma = 1.0 + 0.1 * jax.random.normal(kg, (Cout,), dtype=jnp.float32)
    beta = 0.1 * jax.random.normal(kb, (Cout,), dtype=jnp.float32)

    ref = _reference(x, w, gamma, beta, ksize=K, stride=STRIDE, shortcut=SHORTCUT)

    # Exactness check: f32 MXU path (tight tolerance).
    out_f32 = jax.block_until_ready(
        gelu_conv(x, w, gamma, beta, ksize=K, stride=STRIDE, shortcut=SHORTCUT,
                  mxu_dtype=jnp.float32))
    assert out_f32.shape == (N, Cout, H, W)
    err_f32 = float(jnp.max(jnp.abs(out_f32 - ref)))
    assert jnp.allclose(out_f32, ref, atol=1e-3, rtol=1e-3), err_f32

    # Default perf path: bf16 MXU operands, f32 accumulation (BN/GELU/residual in f32).
    out_bf16 = jax.block_until_ready(
        gelu_conv(x, w, gamma, beta, ksize=K, stride=STRIDE, shortcut=SHORTCUT,
                  mxu_dtype=jnp.bfloat16))
    err_bf16 = float(jnp.max(jnp.abs(out_bf16 - ref)))
    assert jnp.allclose(out_bf16, ref, atol=5e-2, rtol=5e-2), err_bf16

    print("KERNEL_OK")
</pallas_src>

<mosaic_0001>
module attributes {stable_mosaic.version = 11 : i64} {
  func.func @_stats_kernel(%arg0: i32, %arg1: i32, %arg2: memref<1x8x18x4xf32, #tpu.memory_space<vmem>>, %arg3: memref<1x2x18x4xf32, #tpu.memory_space<vmem>>, %arg4: memref<36x4xf32, #tpu.memory_space<vmem>>, %arg5: memref<1x2x4xf32, #tpu.memory_space<vmem>>, %arg6: memref<10x18x4xf32, #tpu.memory_space<vmem>>, %arg7: memref<128x36xf32, #tpu.memory_space<vmem>>) attributes {dimension_semantics = [#tpu.dimension_semantics<parallel>, #tpu.dimension_semantics<parallel>], iteration_bounds = array<i64: 2, 2>, scalar_prefetch = 0 : i64, scratch_operands = 2 : i64, tpu.core_type = #tpu.core_type<tc>, window_params = [{transform_indices = @transform_0, window_bounds = array<i64: 1, 8, 18, 4>}, {transform_indices = @transform_1, window_bounds = array<i64: 1, 2, 18, 4>}, {pipeline_mode = #tpu.pipeline_mode<synchronous>, transform_indices = @transform_2, window_bounds = array<i64: 36, 4>}, {transform_indices = @transform_3, window_bounds = array<i64: 1, 2, 4>}]} {
    %c0 = arith.constant 0 : index
    %c0_0 = arith.constant 0 : index
    %c0_1 = arith.constant 0 : index
    %c0_2 = arith.constant 0 : index
    %0 = vector.load %arg2[%c0, %c0_0, %c0_1, %c0_2] : memref<1x8x18x4xf32, #tpu.memory_space<vmem>>, vector<1x8x18x4xf32>
    %1 = vector.shape_cast %0 : vector<1x8x18x4xf32> to vector<8x18x4xf32>
    %c0_3 = arith.constant 0 : index
    %c0_4 = arith.constant 0 : index
    %c0_5 = arith.constant 0 : index
    %2 = vector.load %arg6[%c0_3, %c0_4, %c0_5] : memref<10x18x4xf32, #tpu.memory_space<vmem>>, vector<8x18x4xf32>
    tpu.vector_store %arg6[%c0_3, %c0_4, %c0_5], %1 {strides = array<i32>} : memref<10x18x4xf32, #tpu.memory_space<vmem>>, vector<8x18x4xf32>,
    %c0_6 = arith.constant 0 : index
    %c0_7 = arith.constant 0 : index
    %c0_8 = arith.constant 0 : index
    %c0_9 = arith.constant 0 : index
    %3 = vector.load %arg3[%c0_6, %c0_7, %c0_8, %c0_9] : memref<1x2x18x4xf32, #tpu.memory_space<vmem>>, vector<1x2x18x4xf32>
    %4 = vector.shape_cast %3 : vector<1x2x18x4xf32> to vector<2x18x4xf32>
    %c8 = arith.constant 8 : index
    %c0_10 = arith.constant 0 : index
    %c0_11 = arith.constant 0 : index
    %5 = vector.load %arg6[%c8, %c0_10, %c0_11] : memref<10x18x4xf32, #tpu.memory_space<vmem>>, vector<2x18x4xf32>
    tpu.vector_store %arg6[%c8, %c0_10, %c0_11], %4 {strides = array<i32>} : memref<10x18x4xf32, #tpu.memory_space<vmem>>, vector<2x18x4xf32>,
    %c0_12 = arith.constant 0 : index
    %c0_13 = arith.constant 0 : index
    %c0_14 = arith.constant 0 : index
    %6 = vector.load %arg6[%c0_12, %c0_13, %c0_14] : memref<10x18x4xf32, #tpu.memory_space<vmem>>, vector<8x16x4xf32>
    %7 = vector.shape_cast %6 : vector<8x16x4xf32> to vector<128x4xf32>
    %c0_15 = arith.constant 0 : index
    %c0_16 = arith.constant 0 : index
    %8 = vector.load %arg7[%c0_15, %c0_16] : memref<128x36xf32, #tpu.memory_space<vmem>>, vector<128x4xf32>
    tpu.vector_store %arg7[%c0_15, %c0_16], %7 {strides = array<i32>} : memref<128x36xf32, #tpu.memory_space<vmem>>, vector<128x4xf32>,
    %c0_17 = arith.constant 0 : index
    %c1 = arith.constant 1 : index
    %c0_18 = arith.constant 0 : index
    %9 = vector.load %arg6[%c0_17, %c1, %c0_18] : memref<10x18x4xf32, #tpu.memory_space<vmem>>, vector<8x16x4xf32>
    %10 = vector.shape_cast %9 : vector<8x16x4xf32> to vector<128x4xf32>
    %c0_19 = arith.constant 0 : index
    %c4 = arith.constant 4 : index
    %11 = vector.load %arg7[%c0_19, %c4] : memref<128x36xf32, #tpu.memory_space<vmem>>, vector<128x4xf32>
    tpu.vector_store %arg7[%c0_19, %c4], %10 {strides = array<i32>} : memref<128x36xf32, #tpu.memory_space<vmem>>, vector<128x4xf32>,
    %c0_20 = arith.constant 0 : index
    %c2 = arith.constant 2 : index
    %c0_21 = arith.constant 0 : index
    %12 = vector.load %arg6[%c0_20, %c2, %c0_21] : memref<10x18x4xf32, #tpu.memory_space<vmem>>, vector<8x16x4xf32>
    %13 = vector.shape_cast %12 : vector<8x16x4xf32> to vector<128x4xf32>
    %c0_22 = arith.constant 0 : index
    %c8_23 = arith.constant 8 : index
    %14 = vector.load %arg7[%c0_22, %c8_23] : memref<128x36xf32, #tpu.memory_space<vmem>>, vector<128x4xf32>
    tpu.vector_store %arg7[%c0_22, %c8_23], %13 {strides = array<i32>} : memref<128x36xf32, #tpu.memory_space<vmem>>, vector<128x4xf32>,
    %c1_24 = arith.constant 1 : index
    %c0_25 = arith.constant 0 : index
    %c0_26 = arith.constant 0 : index
    %15 = vector.load %arg6[%c1_24, %c0_25, %c0_26] : memref<10x18x4xf32, #tpu.memory_space<vmem>>, vector<8x16x4xf32>
    %16 = vector.shape_cast %15 : vector<8x16x4xf32> to vector<128x4xf32>
    %c0_27 = arith.constant 0 : index
    %c12 = arith.constant 12 : index
    %17 = vector.load %arg7[%c0_27, %c12] : memref<128x36xf32, #tpu.memory_space<vmem>>, vector<128x4xf32>
    tpu.vector_store %arg7[%c0_27, %c12], %16 {strides = array<i32>} : memref<128x36xf32, #tpu.memory_space<vmem>>, vector<128x4xf32>,
    %c1_28 = arith.constant 1 : index
    %c1_29 = arith.constant 1 : index
    %c0_30 = arith.constant 0 : index
    %18 = vector.load %arg6[%c1_28, %c1_29, %c0_30] : memref<10x18x4xf32, #tpu.memory_space<vmem>>, vector<8x16x4xf32>
    %19 = vector.shape_cast %18 : vector<8x16x4xf32> to vector<128x4xf32>
    %c0_31 = arith.constant 0 : index
    %c16 = arith.constant 16 : index
    %20 = vector.load %arg7[%c0_31, %c16] : memref<128x36xf32, #tpu.memory_space<vmem>>, vector<128x4xf32>
    tpu.vector_store %arg7[%c0_31, %c16], %19 {strides = array<i32>} : memref<128x36xf32, #tpu.memory_space<vmem>>, vector<128x4xf32>,
    %c1_32 = arith.constant 1 : index
    %c2_33 = arith.constant 2 : index
    %c0_34 = arith.constant 0 : index
    %21 = vector.load %arg6[%c1_32, %c2_33, %c0_34] : memref<10x18x4xf32, #tpu.memory_space<vmem>>, vector<8x16x4xf32>
    %22 = vector.shape_cast %21 : vector<8x16x4xf32> to vector<128x4xf32>
    %c0_35 = arith.constant 0 : index
    %c20 = arith.constant 20 : index
    %23 = vector.load %arg7[%c0_35, %c20] : memref<128x36xf32, #tpu.memory_space<vmem>>, vector<128x4xf32>
    tpu.vector_store %arg7[%c0_35, %c20], %22 {strides = array<i32>} : memref<128x36xf32, #tpu.memory_space<vmem>>, vector<128x4xf32>,
    %c2_36 = arith.constant 2 : index
    %c0_37 = arith.constant 0 : index
    %c0_38 = arith.constant 0 : index
    %24 = vector.load %arg6[%c2_36, %c0_37, %c0_38] : memref<10x18x4xf32, #tpu.memory_space<vmem>>, vector<8x16x4xf32>
    %25 = vector.shape_cast %24 : vector<8x16x4xf32> to vector<128x4xf32>
    %c0_39 = arith.constant 0 : index
    %c24 = arith.constant 24 : index
    %26 = vector.load %arg7[%c0_39, %c24] : memref<128x36xf32, #tpu.memory_space<vmem>>, vector<128x4xf32>
    tpu.vector_store %arg7[%c0_39, %c24], %25 {strides = array<i32>} : memref<128x36xf32, #tpu.memory_space<vmem>>, vector<128x4xf32>,
    %c2_40 = arith.constant 2 : index
    %c1_41 = arith.constant 1 : index
    %c0_42 = arith.constant 0 : index
    %27 = vector.load %arg6[%c2_40, %c1_41, %c0_42] : memref<10x18x4xf32, #tpu.memory_space<vmem>>, vector<8x16x4xf32>
    %28 = vector.shape_cast %27 : vector<8x16x4xf32> to vector<128x4xf32>
    %c0_43 = arith.constant 0 : index
    %c28 = arith.constant 28 : index
    %29 = vector.load %arg7[%c0_43, %c28] : memref<128x36xf32, #tpu.memory_space<vmem>>, vector<128x4xf32>
    tpu.vector_store %arg7[%c0_43, %c28], %28 {strides = array<i32>} : memref<128x36xf32, #tpu.memory_space<vmem>>, vector<128x4xf32>,
    %c2_44 = arith.constant 2 : index
    %c2_45 = arith.constant 2 : index
    %c0_46 = arith.constant 0 : index
    %30 = vector.load %arg6[%c2_44, %c2_45, %c0_46] : memref<10x18x4xf32, #tpu.memory_space<vmem>>, vector<8x16x4xf32>
    %31 = vector.shape_cast %30 : vector<8x16x4xf32> to vector<128x4xf32>
    %c0_47 = arith.constant 0 : index
    %c32 = arith.constant 32 : index
    %32 = vector.load %arg7[%c0_47, %c32] : memref<128x36xf32, #tpu.memory_space<vmem>>, vector<128x4xf32>
    tpu.vector_store %arg7[%c0_47, %c32], %31 {strides = array<i32>} : memref<128x36xf32, #tpu.memory_space<vmem>>, vector<128x4xf32>,
    %c0_48 = arith.constant 0 : index
    %c0_49 = arith.constant 0 : index
    %33 = vector.load %arg7[%c0_48, %c0_49] : memref<128x36xf32, #tpu.memory_space<vmem>>, vector<128x36xf32>
    %c0_50 = arith.constant 0 : index
    %c0_51 = arith.constant 0 : index
    %34 = vector.load %arg4[%c0_50, %c0_51] : memref<36x4xf32, #tpu.memory_space<vmem>>, vector<36x4xf32>
    %cst = arith.constant dense<0.000000e+00> : vector<128x4xf32>
    %35 = tpu.matmul %33, %34, %cst {dimension_numbers = #tpu.dot_dimension_numbers<[1], [0], [0], [1], [0, 0, 1, 1], [], []>} : vector<128x36xf32>, vector<36x4xf32>, vector<128x4xf32> -> vector<128x4xf32>
    %c1_52 = arith.constant 1 : index
    %c1_53 = arith.constant 1 : index
    %c0_54 = arith.constant 0 : index
    %36 = vector.load %arg6[%c1_52, %c1_53, %c0_54] : memref<10x18x4xf32, #tpu.memory_space<vmem>>, vector<8x16x4xf32>
    %37 = vector.shape_cast %36 : vector<8x16x4xf32> to vector<128x4xf32>
    %38 = arith.addf %35, %37 : vector<128x4xf32>
    %cst_55 = arith.constant dense<0.000000e+00> : vector<4xf32>
    %39 = vector.multi_reduction <add>, %38, %cst_55 [0] : vector<128x4xf32> to vector<4xf32>
    %40 = vector.shape_cast %39 : vector<4xf32> to vector<1x4xf32>
    %cst_56 = arith.constant 7.812500e-03 : f32
    %41 = vector.broadcast %cst_56 : f32 to vector<1x4xf32>
    %42 = arith.mulf %40, %41 : vector<1x4xf32>
    %43 = vector.broadcast %42 : vector<1x4xf32> to vector<128x4xf32>
    %44 = arith.subf %38, %43 : vector<128x4xf32>
    %45 = arith.mulf %44, %44 : vector<128x4xf32>
    %cst_57 = arith.constant dense<0.000000e+00> : vector<4xf32>
    %46 = vector.multi_reduction <add>, %45, %cst_57 [0] : vector<128x4xf32> to vector<4xf32>
    %47 = vector.shape_cast %46 : vector<4xf32> to vector<1x4xf32>
    %c0_58 = arith.constant 0 : index
    %c0_59 = arith.constant 0 : index
    %c0_60 = arith.constant 0 : index
    %48 = vector.load %arg5[%c0_58, %c0_59, %c0_60] : memref<1x2x4xf32, #tpu.memory_space<vmem>>, vector<1x1x4xf32>
    %49 = vector.shape_cast %48 : vector<1x1x4xf32> to vector<1x4xf32>
    %50 = vector.shape_cast %40 : vector<1x4xf32> to vector<1x1x4xf32>
    tpu.vector_store %arg5[%c0_58, %c0_59, %c0_60], %50 {strides = array<i32>} : memref<1x2x4xf32, #tpu.memory_space<vmem>>, vector<1x1x4xf32>,
    %c0_61 = arith.constant 0 : index
    %c1_62 = arith.constant 1 : index
    %c0_63 = arith.constant 0 : index
    %51 = vector.load %arg5[%c0_61, %c1_62, %c0_63] : memref<1x2x4xf32, #tpu.memory_space<vmem>>, vector<1x1x4xf32>
    %52 = vector.shape_cast %51 : vector<1x1x4xf32> to vector<1x4xf32>
    %53 = vector.shape_cast %47 : vector<1x4xf32> to vector<1x1x4xf32>
    tpu.vector_store %arg5[%c0_61, %c1_62, %c0_63], %53 {strides = array<i32>} : memref<1x2x4xf32, #tpu.memory_space<vmem>>, vector<1x1x4xf32>,
    return
  }
  func.func @transform_0(%arg0: i32, %arg1: i32) -> (i32, i32, i32, i32) {
    %c0_i32 = arith.constant 0 : i32
    %c0_i32_0 = arith.constant 0 : i32
    %c0_i32_1 = arith.constant 0 : i32
    return %arg0, %arg1, %c0_i32, %c0_i32_0 : i32, i32, i32, i32
  }
  func.func @transform_1(%arg0: i32, %arg1: i32) -> (i32, i32, i32, i32) {
    %c2_i32 = arith.constant 2 : i32
    %0 = arith.muli %arg0, %c2_i32 : i32
    %1 = arith.addi %0, %arg1 : i32
    %c0_i32 = arith.constant 0 : i32
    %c0_i32_0 = arith.constant 0 : i32
    %c0_i32_1 = arith.constant 0 : i32
    %c0_i32_2 = arith.constant 0 : i32
    return %1, %c0_i32, %c0_i32_0, %c0_i32_1 : i32, i32, i32, i32
  }
  func.func @transform_2(%arg0: i32, %arg1: i32) -> (i32, i32) {
    %c0_i32 = arith.constant 0 : i32
    %c0_i32_0 = arith.constant 0 : i32
    %c0_i32_1 = arith.constant 0 : i32
    return %c0_i32, %c0_i32_0 : i32, i32
  }
  func.func @transform_3(%arg0: i32, %arg1: i32) -> (i32, i32, i32) {
    %c2_i32 = arith.constant 2 : i32
    %0 = arith.muli %arg0, %c2_i32 : i32
    %1 = arith.addi %0, %arg1 : i32
    %c0_i32 = arith.constant 0 : i32
    %c0_i32_0 = arith.constant 0 : i32
    %c0_i32_1 = arith.constant 0 : i32
    return %1, %c0_i32, %c0_i32_0 : i32, i32, i32
  }
}

</mosaic_0001>

<llo_original>
// kernel: tpu_custom_call.1
$region0: #{tpu_custom_call.1}
  #allocation0 [shape = 'u32[]', space=smem, size = 0x4, offset = 0x4, fixed_abs, tag = 'smem constant byte address 0x4 - core index']
  #allocation1 [shape = 'u32[144,128]{1,0:T(1,128)}', space=vmem, size = 0x12000, scoped, tag = 'internal scratch']
  #allocation2 [shape = 'f32[10,18,4]{2,1,0:T(8,128)}', space=vmem, size = 0x1e000, scoped, tag = 'scratch operand']
  #allocation3 [shape = 'f32[128,36]{1,0:T(8,128)}', space=vmem, size = 0x10000, scoped, tag = 'scratch operand']
  %s0 = inlined_call_operand.vmem [shape: f32[2,18,18,4], index: 0, kind: input, shape index: {}]
  %s1 = inlined_call_operand.vmem [shape: f32[4,2,18,4], index: 1, kind: input, shape index: {}]
  %s2 = inlined_call_operand.vmem [shape: f32[36,4], index: 2, kind: input, shape index: {}]
  %s3 = inlined_call_operand.hbm [shape: f32[4,2,4], index: 3, kind: output, shape index: {}]
  %s4 = sld [smem:[#allocation0]]
  $region45: #{tpu_custom_call.1} parent=0
    _
  %s6 = ssub.s32 1, %s4
  %s7 = scalar_select 0, %s6, %s4
  $region1: #{tpu_custom_call.1} parent=0
    #allocation4 [shape = 'u8[2048]{0}', space=vmem, size = 0x800, scoped, tag = 'output window, operand 0']
    #allocation5 [shape = 's32[2]{0}', space=sflag, size = 0x8, scoped, tag = 'scoped memory for tpu_custom_call.1']
    %8 = vsyncpa [#allocation5], 0
    %s9 = scalar_lea.sflag [#allocation5], 1
    %10 = vsyncpa %s9, 0
    loop: start=0, step=1, limit=6
    $region2: #{tpu_custom_call.1} parent=1 // loop_pre_header
      _
    $region3: #{tpu_custom_call.1} parent=1 // loop_header
      %s12 = sphi 0, %s16
      %p13 = scmp.ge.s32.totalorder %s12, 6
      %s19 = sphi 0, %s31
      %s20 = sphi 0, %s27
      %s21 = sphi 0, %s19
      %s22 = sphi 0, %s20
      %s23 = sphi 0, %s21
      %s24 = sphi 0, %s22
      %s36 = sphi 0, %s38
      %s39 = sphi 0, %s36
      %s40 = sphi 0, %s39
      %s56 = sphi 0, %s40
      %s66 = sphi 0, %s68
      %s69 = sphi 0, %s66
      %s70 = sphi 0, %s69
      %s86 = sphi 0, %s70
      %s90 = sphi 0, %s90
      %s92 = sphi 0, %s90
      %s93 = sphi 0, %s92
      %s107 = sphi 0, %s93
      %s117 = sphi 0, %s119
      %s120 = sphi 0, %s117
      %s121 = sphi 0, %s120
      %s137 = sphi 0, %s121
    $region4: #{tpu_custom_call.1} parent=1 // loop_header_branch
      %15 = sbr.rel (%p13) target = $region8
    $region5: #{tpu_custom_call.1} parent=1 // loop_body
      %s17 = ssub.s32 %s12, 1
      %s18 = ssub.s32 %s12, 2
      %s25 = sadd.s32 1, %s20
      %p26 = scmp.ge.s32.totalorder %s25, 2
      %s27 = scalar_select %p26, 0, %s25
      %s28 = sadd.s32 1, %s19
      %s29 = scalar_select %p26, %s28, %s19
      %p30 = scmp.ge.s32.totalorder %s29, 2
      %s31 = scalar_select %p30, 0, %s29
      %s32 = ssub.s32 %s19, %s31
      %s33 = ssub.s32 %s20, %s27
      %s34 = sor.u32 %s32, %s33
      %p35 = scmp.eq.s32.totalorder %s34, 0
      %s37 = sadd.s32 %s36, 1
      %s38 = scalar_select %p35, %s36, %s37
      %p41 = pneg %p35
      %p42 = scmp.eq.s32.totalorder %s12, 3
      %p43 = por %p41, %p42
      %p44 = scmp.ne.s32.totalorder %s36, %s39
      %p45 = scmp.eq.s32.totalorder %s12, 0
      %p46 = por %p44, %p45
      %p47 = scmp.ne.s32.totalorder %s36, %s39
      %p48 = scmp.eq.s32.totalorder %s17, 3
      %p49 = por %p47, %p48
      %p50 = scmp.ne.s32.totalorder %s39, %s40
      %p51 = scmp.eq.s32.totalorder %s17, 0
      %p52 = por %p50, %p51
      %p53 = scmp.ne.s32.totalorder %s39, %s40
      %p54 = scmp.eq.s32.totalorder %s18, 3
      %p55 = por %p53, %p54
      %p57 = scmp.ne.s32.totalorder %s40, %s56
      %p58 = scmp.eq.s32.totalorder %s18, 0
      %p59 = por %p57, %p58
      %s60 = smul.u32 %s19, 2
      %s61 = sadd.s32 %s60, %s20
      %s62 = smul.u32 %s31, 2
      %s63 = sadd.s32 %s62, %s27
      %s64 = ssub.s32 %s61, %s63
      %p65 = scmp.eq.s32.totalorder %s64, 0
      %s67 = sadd.s32 %s66, 1
      %s68 = scalar_select %p65, %s66, %s67
      %p71 = pneg %p65
      %p72 = scmp.eq.s32.totalorder %s12, 3
      %p73 = por %p71, %p72
      %p74 = scmp.ne.s32.totalorder %s66, %s69
      %p75 = scmp.eq.s32.totalorder %s12, 0
      %p76 = por %p74, %p75
      %p77 = scmp.ne.s32.totalorder %s66, %s69
      %p78 = scmp.eq.s32.totalorder %s17, 3
      %p79 = por %p77, %p78
      %p80 = scmp.ne.s32.totalorder %s69, %s70
      %p81 = scmp.eq.s32.totalorder %s17, 0
      %p82 = por %p80, %p81
      %p83 = scmp.ne.s32.totalorder %s69, %s70
      %p84 = scmp.eq.s32.totalorder %s18, 3
      %p85 = por %p83, %p84
      %p87 = scmp.ne.s32.totalorder %s70, %s86
      %p88 = scmp.eq.s32.totalorder %s18, 0
      %p89 = por %p87, %p88
      %s91 = sadd.s32 %s90, 1
      %p94 = scmp.eq.s32.totalorder %s12, 3
      %p95 = scmp.ne.s32.totalorder %s90, %s92
      %p96 = scmp.eq.s32.totalorder %s12, 0
      %p97 = por %p95, %p96
      %p98 = scmp.ne.s32.totalorder %s90, %s92
      %p99 = scmp.eq.s32.totalorder %s17, 3
      %p100 = por %p98, %p99
      %p101 = scmp.ne.s32.totalorder %s92, %s93
      %p102 = scmp.eq.s32.totalorder %s17, 0
      %p103 = por %p101, %p102
      %p104 = scmp.ne.s32.totalorder %s92, %s93
      %p105 = scmp.eq.s32.totalorder %s18, 3
      %p106 = por %p104, %p105
      %p108 = scmp.ne.s32.totalorder %s93, %s107
      %p109 = scmp.eq.s32.totalorder %s18, 0
      %p110 = por %p108, %p109
      %s111 = smul.u32 %s19, 2
      %s112 = sadd.s32 %s111, %s20
      %s113 = smul.u32 %s31, 2
      %s114 = sadd.s32 %s113, %s27
      %s115 = ssub.s32 %s112, %s114
      %p116 = scmp.eq.s32.totalorder %s115, 0
      %s118 = sadd.s32 %s117, 1
      %s119 = scalar_select %p116, %s117, %s118
      %p122 = pneg %p116
      %p123 = scmp.eq.s32.totalorder %s12, 3
      %p124 = por %p122, %p123
      %p125 = scmp.ne.s32.totalorder %s117, %s120
      %p126 = scmp.eq.s32.totalorder %s12, 0
      %p127 = por %p125, %p126
      %p128 = scmp.ne.s32.totalorder %s117, %s120
      %p129 = scmp.eq.s32.totalorder %s17, 3
      %p130 = por %p128, %p129
      %p131 = scmp.ne.s32.totalorder %s120, %s121
      %p132 = scmp.eq.s32.totalorder %s17, 0
      %p133 = por %p131, %p132
      %p134 = scmp.ne.s32.totalorder %s120, %s121
      %p135 = scmp.eq.s32.totalorder %s18, 3
      %p136 = por %p134, %p135
      %p138 = scmp.ne.s32.totalorder %s121, %s137
      %p139 = scmp.eq.s32.totalorder %s18, 0
      %p140 = por %p138, %p139
      %p141 = scmp.le.s32.totalorder 1, %s12
      %p142 = scmp.lt.s32.totalorder %s12, 5
      %p143 = pnand %p141, %p142
      %p144 = pneg %p143
      // Predicated region
      $region9: #{tpu_custom_call.1} parent=5 // pred_check
        _
      $region10: #{tpu_custom_call.1} parent=5 // pred_check_branch
        %146 = sbr.rel (%p143) target = $region12
      $region11: #{tpu_custom_call.1} parent=5 // pred_region
        %s147 = ssub.s32 %s12, 1
        // Predicated region
        $region13: #{tpu_custom_call.1} parent=11 // pred_check
          %p148 = pneg %p103
        $region14: #{tpu_custom_call.1} parent=11 // pred_check_branch
          %150 = sbr.rel (%p148) target = $region16
        $region15: #{tpu_custom_call.1} parent=11 // pred_region
          _
        $region16: #{tpu_custom_call.1} parent=11 // pred_fallthru
          _
      $region12: #{tpu_custom_call.1} parent=5 // pred_fallthru
        _
      %p151 = scmp.lt.s32.totalorder %s12, 4
      // Predicated region
      $region17: #{tpu_custom_call.1} parent=5 // pred_check
        %p152 = pneg %p151
      $region18: #{tpu_custom_call.1} parent=5 // pred_check_branch
        %154 = sbr.rel (%p152) target = $region20
      $region19: #{tpu_custom_call.1} parent=5 // pred_region
        // Predicated region
        $region21: #{tpu_custom_call.1} parent=19 // pred_check
          %p155 = pneg %p46
        $region22: #{tpu_custom_call.1} parent=19 // pred_check_branch
          %157 = sbr.rel (%p155) target = $region24
        $region23: #{tpu_custom_call.1} parent=19 // pred_region
          %s158 = smul.u32 8, %s20
          %s159 = ssub.s32 18, %s158
          %p160 = scmp.lt.s32.totalorder %s159, 8
          %s161 = scalar_select %p160, %s159, 8
          %s162 = smul.u32 128, %s161
          %s163 = smul.u32 %s162, 3
          %p164 = scmp.lt.s32.totalorder %s19, 1
          %s165 = scalar_select %p164, %s19, 1
          %p166 = scmp.lt.s32.totalorder %s158, 17
          %s167 = scalar_select %p166, %s158, 17
          %s168 = smul.addr %s167, 3
          %s169 = smul.addr %s165, 54
          %s170 = sadd.s32 %s168, %s169
          %s171 = smul.addr %s170, 8
          %s172 = scalar_lea.vmem %s0, %s171
          %s173 = smul.u32 8, %s20
          %s174 = ssub.s32 18, %s173
          %p175 = scmp.lt.s32.totalorder %s174, 8
          %s176 = scalar_select %p175, %s174, 8
          %s177 = smul.u32 128, %s176
          %s178 = smul.u32 %s177, 3
        $region24: #{tpu_custom_call.1} parent=19 // pred_fallthru
          _
        // Predicated region
        $region25: #{tpu_custom_call.1} parent=19 // pred_check
          %p179 = pneg %p76
        $region26: #{tpu_custom_call.1} parent=19 // pred_check_branch
          %181 = sbr.rel (%p179) target = $region28
        $region27: #{tpu_custom_call.1} parent=19 // pred_region
          %s182 = smul.u32 %s19, 2
          %s183 = sadd.s32 %s182, %s20
          %p184 = scmp.lt.s32.totalorder %s183, 3
          %s185 = scalar_select %p184, %s183, 3
          %s186 = smul.addr %s185, 6
          %s187 = smul.addr %s186, 8
          %s188 = scalar_lea.vmem %s1, %s187
          %s189 = smul.u32 %s19, 2
          %s190 = sadd.s32 %s189, %s20
        $region28: #{tpu_custom_call.1} parent=19 // pred_fallthru
          _
      $region20: #{tpu_custom_call.1} parent=5 // pred_fallthru
        _
      %p191 = scmp.le.s32.totalorder 1, %s12
      %p192 = scmp.lt.s32.totalorder %s12, 5
      %p193 = pnand %p191, %p192
      %p194 = pneg %p193
      // Predicated region
      $region29: #{tpu_custom_call.1} parent=5 // pred_check
        _
      $region30: #{tpu_custom_call.1} parent=5 // pred_check_branch
        %196 = sbr.rel (%p193) target = $region32
      $region31: #{tpu_custom_call.1} parent=5 // pred_region
        %s197 = ssub.s32 %s12, 1
        %s198 = smul.u32 8, %s22
        %s199 = ssub.s32 18, %s198
        %p200 = scmp.lt.s32.totalorder %s199, 8
        %s201 = scalar_select %p200, %s199, 8
        %s202 = smul.u32 128, %s201
        %s203 = smul.u32 %s202, 3
        %p204 = scmp.lt.s32.totalorder %s21, 1
        %s205 = scalar_select %p204, %s21, 1
        %p206 = scmp.lt.s32.totalorder %s198, 17
        %s207 = scalar_select %p206, %s198, 17
        %s208 = smul.addr %s207, 3
        %s209 = smul.addr %s205, 54
        %s210 = sadd.s32 %s208, %s209
        %s211 = smul.addr %s210, 8
        %s212 = scalar_lea.vmem %s0, %s211
        %p213 = pneg %p52
        %p214 = pneg %p49
        %s215 = smul.u32 %s21, 2
        %s216 = sadd.s32 %s215, %s22
        %p217 = scmp.lt.s32.totalorder %s216, 3
        %s218 = scalar_select %p217, %s216, 3
        %s219 = smul.addr %s218, 6
        %s220 = smul.addr %s219, 8
        %s221 = scalar_lea.vmem %s1, %s220
        %p222 = pneg %p82
        %p223 = pneg %p79
        %p224 = pneg %p103
        %p225 = pneg %p100
        %p226 = pneg %p133
        %p227 = pneg %p130
        %s228 = sand.u32 %s120, 1
        %s229 = scalar_lea.sflag [#allocation5], %s228
        %s230 = sand.u32 %s120, 1
        %s231 = smul.addr %s230, 2
        %s232 = scalar_lea.vmem [#allocation4], %s231
        %s233 = smul.u32 8, %s22
        %s234 = ssub.s32 18, %s233
        %p235 = scmp.lt.s32.totalorder %s234, 8
        %s236 = scalar_select %p235, %s234, 8
        %s237 = smul.u32 128, %s236
        %s238 = smul.u32 %s237, 3
        %p239 = scmp.lt.s32.totalorder %s21, 1
        %s240 = scalar_select %p239, %s21, 1
        %p241 = scmp.lt.s32.totalorder %s233, 17
        %s242 = scalar_select %p241, %s233, 17
        %s243 = smul.addr %s242, 3
        %s244 = smul.addr %s240, 54
        %s245 = sadd.s32 %s243, %s244
        %s246 = smul.addr %s245, 8
        %s247 = scalar_lea.vmem %s0, %s246
        %s248 = smul.u32 8, %s22
        %s249 = ssub.s32 18, %s248
        %p250 = scmp.lt.s32.totalorder %s249, 8
        %s251 = scalar_select %p250, %s249, 8
        %s252 = smul.u32 128, %s251
        %s253 = smul.u32 %s252, 3
        %s254 = smul.u32 %s21, 2
        %s255 = sadd.s32 %s254, %s22
        %p256 = scmp.lt.s32.totalorder %s255, 3
        %s257 = scalar_select %p256, %s255, 3
        %s258 = smul.addr %s257, 6
        %s259 = smul.addr %s258, 8
        %s260 = scalar_lea.vmem %s1, %s259
        %s261 = smul.u32 %s21, 2
        %s262 = sadd.s32 %s261, %s22
        %s263 = smul.u32 %s21, 2
        %s264 = sadd.s32 %s263, %s22
        %v265 = vld [vmem:[%s247] sm:$0xff]
        %v266 = vld [vmem:[%s247 + $0x8] sm:$0xff]
        %v267 = vld [vmem:[%s247 + $0x10] sm:$0x3]
        %v268 = vld [vmem:[%s247 + $0x18] sm:$0xff]
        %v269 = vld [vmem:[%s247 + $0x20] sm:$0xff]
        %v270 = vld [vmem:[%s247 + $0x28] sm:$0x3]
        %v271 = vld [vmem:[%s247 + $0x30] sm:$0xff]
        %v272 = vld [vmem:[%s247 + $0x38] sm:$0xff]
        %v273 = vld [vmem:[%s247 + $0x40] sm:$0x3]
        %v274 = vld [vmem:[%s247 + $0x48] sm:$0xff]
        %v275 = vld [vmem:[%s247 + $0x50] sm:$0xff]
        %v276 = vld [vmem:[%s247 + $0x58] sm:$0x3]
        %v277 = vld [vmem:[%s247 + $0x60] sm:$0xff]
        %v278 = vld [vmem:[%s247 + $0x68] sm:$0xff]
        %v279 = vld [vmem:[%s247 + $0x70] sm:$0x3]
        %v280 = vld [vmem:[%s247 + $0x78] sm:$0xff]
        %v281 = vld [vmem:[%s247 + $0x80] sm:$0xff]
        %v282 = vld [vmem:[%s247 + $0x88] sm:$0x3]
        %v283 = vld [vmem:[%s247 + $0x90] sm:$0xff]
        %v284 = vld [vmem:[%s247 + $0x98] sm:$0xff]
        %v285 = vld [vmem:[%s247 + $0xa0] sm:$0x3]
        %v286 = vld [vmem:[%s247 + $0xa8] sm:$0xff]
        %v287 = vld [vmem:[%s247 + $0xb0] sm:$0xff]
        %v288 = vld [vmem:[%s247 + $0xb8] sm:$0x3]
        %vm289 = vcmask 31744
        %290 = vst.msk [vmem:[#allocation2] sm:$0xff] %vm289, %v265
        %291 = vst.msk [vmem:[#allocation2 + $0x8] sm:$0xff] %vm289, %v266
        %vm292 = vcmask 25600
        %293 = vst.msk [vmem:[#allocation2 + $0x10] sm:$0x3] %vm292, %v267
        %294 = vst.msk [vmem:[#allocation2 + $0x18] sm:$0xff] %vm289, %v268
        %295 = vst.msk [vmem:[#allocation2 + $0x20] sm:$0xff] %vm289, %v269
        %296 = vst.msk [vmem:[#allocation2 + $0x28] sm:$0x3] %vm292, %v270
        %297 = vst.msk [vmem:[#allocation2 + $0x30] sm:$0xff] %vm289, %v271
        %298 = vst.msk [vmem:[#allocation2 + $0x38] sm:$0xff] %vm289, %v272
        %299 = vst.msk [vmem:[#allocation2 + $0x40] sm:$0x3] %vm292, %v273
        %300 = vst.msk [vmem:[#allocation2 + $0x48] sm:$0xff] %vm289, %v274
        %301 = vst.msk [vmem:[#allocation2 + $0x50] sm:$0xff] %vm289, %v275
        %302 = vst.msk [vmem:[#allocation2 + $0x58] sm:$0x3] %vm292, %v276
        %303 = vst.msk [vmem:[#allocation2 + $0x60] sm:$0xff] %vm289, %v277
        %304 = vst.msk [vmem:[#allocation2 + $0x68] sm:$0xff] %vm289, %v278
        %305 = vst.msk [vmem:[#allocation2 + $0x70] sm:$0x3] %vm292, %v279
        %306 = vst.msk [vmem:[#allocation2 + $0x78] sm:$0xff] %vm289, %v280
        %307 = vst.msk [vmem:[#allocation2 + $0x80] sm:$0xff] %vm289, %v281
        %308 = vst.msk [vmem:[#allocation2 + $0x88] sm:$0x3] %vm292, %v282
        %309 = vst.msk [vmem:[#allocation2 + $0x90] sm:$0xff] %vm289, %v283
        %310 = vst.msk [vmem:[#allocation2 + $0x98] sm:$0xff] %vm289, %v284
        %311 = vst.msk [vmem:[#allocation2 + $0xa0] sm:$0x3] %vm292, %v285
        %312 = vst.msk [vmem:[#allocation2 + $0xa8] sm:$0xff] %vm289, %v286
        %313 = vst.msk [vmem:[#allocation2 + $0xb0] sm:$0xff] %vm289, %v287
        %314 = vst.msk [vmem:[#allocation2 + $0xb8] sm:$0x3] %vm292, %v288
        %v315 = vld [vmem:[%s260] sm:$0xff]
        %v316 = vld [vmem:[%s260 + $0x8] sm:$0xff]
        %v317 = vld [vmem:[%s260 + $0x10] sm:$0x3]
        %v318 = vld [vmem:[%s260 + $0x18] sm:$0xff]
        %v319 = vld [vmem:[%s260 + $0x20] sm:$0xff]
        %v320 = vld [vmem:[%s260 + $0x28] sm:$0x3]
        %s321 = scalar_lea.vmem [#allocation2], 192
        %322 = vst.msk [vmem:[%s321] sm:$0xff] %vm289, %v315
        %323 = vst.msk [vmem:[%s321 + $0x8] sm:$0xff] %vm289, %v316
        %324 = vst.msk [vmem:[%s321 + $0x10] sm:$0x3] %vm292, %v317
        %325 = vst.msk [vmem:[%s321 + $0x18] sm:$0xff] %vm289, %v318
        %326 = vst.msk [vmem:[%s321 + $0x20] sm:$0xff] %vm289, %v319
        %327 = vst.msk [vmem:[%s321 + $0x28] sm:$0x3] %vm292, %v320
        %v328 = vld [vmem:[#allocation2] sm:$0xff]
        %v329 = vld [vmem:[#allocation2 + $0x8] sm:$0xff]
        %v330 = vld [vmem:[#allocation2 + $0x18] sm:$0xff]
        %v331 = vld [vmem:[#allocation2 + $0x20] sm:$0xff]
        %v332 = vld [vmem:[#allocation2 + $0x30] sm:$0xff]
        %v333 = vld [vmem:[#allocation2 + $0x38] sm:$0xff]
        %v334 = vld [vmem:[#allocation2 + $0x48] sm:$0xff]
        %v335 = vld [vmem:[#allocation2 + $0x50] sm:$0xff]
        %v336 = vld [vmem:[#allocation2 + $0x60] sm:$0xff]
        %v337 = vld [vmem:[#allocation2 + $0x68] sm:$0xff]
        %v338 = vld [vmem:[#allocation2 + $0x78] sm:$0xff]
        %v339 = vld [vmem:[#allocation2 + $0x80] sm:$0xff]
        %v340 = vld [vmem:[#allocation2 + $0x90] sm:$0xff]
        %v341 = vld [vmem:[#allocation2 + $0x98] sm:$0xff]
        %v342 = vld [vmem:[#allocation2 + $0xa8] sm:$0xff]
        %v343 = vld [vmem:[#allocation2 + $0xb0] sm:$0xff]
        %344 = vst.msk [vmem:[#allocation3] sm:$0xff] %vm289, %v328
        %345 = vst.msk [vmem:[#allocation3 + $0x8] sm:$0xff] %vm289, %v329
        %346 = vst.msk [vmem:[#allocation3 + $0x10] sm:$0xff] %vm289, %v330
        %347 = vst.msk [vmem:[#allocation3 + $0x18] sm:$0xff] %vm289, %v331
        %348 = vst.msk [vmem:[#allocation3 + $0x20] sm:$0xff] %vm289, %v332
        %349 = vst.msk [vmem:[#allocation3 + $0x28] sm:$0xff] %vm289, %v333
        %350 = vst.msk [vmem:[#allocation3 + $0x30] sm:$0xff] %vm289, %v334
        %351 = vst.msk [vmem:[#allocation3 + $0x38] sm:$0xff] %vm289, %v335
        %352 = vst.msk [vmem:[#allocation3 + $0x40] sm:$0xff] %vm289, %v336
        %353 = vst.msk [vmem:[#allocation3 + $0x48] sm:$0xff] %vm289, %v337
        %354 = vst.msk [vmem:[#allocation3 + $0x50] sm:$0xff] %vm289, %v338
        %355 = vst.msk [vmem:[#allocation3 + $0x58] sm:$0xff] %vm289, %v339
        %356 = vst.msk [vmem:[#allocation3 + $0x60] sm:$0xff] %vm289, %v340
        %357 = vst.msk [vmem:[#allocation3 + $0x68] sm:$0xff] %vm289, %v341
        %358 = vst.msk [vmem:[#allocation3 + $0x70] sm:$0xff] %vm289, %v342
        %359 = vst.msk [vmem:[#allocation3 + $0x78] sm:$0xff] %vm289, %v343
        %v360 = vld [vmem:[#allocation2 + $0x1] sm:$0xff]
        %v361 = vld [vmem:[#allocation2 + $0x9] sm:$0xff]
        %v362 = vld [vmem:[#allocation2 + $0x19] sm:$0xff]
        %v363 = vld [vmem:[#allocation2 + $0x21] sm:$0xff]
        %v364 = vld [vmem:[#allocation2 + $0x31] sm:$0xff]
        %v365 = vld [vmem:[#allocation2 + $0x39] sm:$0xff]
        %v366 = vld [vmem:[#allocation2 + $0x49] sm:$0xff]
        %v367 = vld [vmem:[#allocation2 + $0x51] sm:$0xff]
        %v368 = vld [vmem:[#allocation2 + $0x61] sm:$0xff]
        %v369 = vld [vmem:[#allocation2 + $0x69] sm:$0xff]
        %v370 = vld [vmem:[#allocation2 + $0x79] sm:$0xff]
        %v371 = vld [vmem:[#allocation2 + $0x81] sm:$0xff]
        %v372 = vld [vmem:[#allocation2 + $0x91] sm:$0xff]
        %v373 = vld [vmem:[#allocation2 + $0x99] sm:$0xff]
        %v374 = vld [vmem:[#allocation2 + $0xa9] sm:$0xff]
        %v375 = vld [vmem:[#allocation2 + $0xb1] sm:$0xff]
        %392 = vrot.lane.b32.xlu0 %v360, 4
        %v393 = vpop.permute.xlu0 %392
        %394 = vrot.lane.b32.xlu0 %v361, 4
        %v395 = vpop.permute.xlu0 %394
        %396 = vrot.lane.b32.xlu0 %v362, 4
        %v397 = vpop.permute.xlu0 %396
        %398 = vrot.lane.b32.xlu0 %v363, 4
        %v399 = vpop.permute.xlu0 %398
        %400 = vrot.lane.b32.xlu0 %v364, 4
        %v401 = vpop.permute.xlu0 %400
        %402 = vrot.lane.b32.xlu0 %v365, 4
        %v403 = vpop.permute.xlu0 %402
        %404 = vrot.lane.b32.xlu0 %v366, 4
        %v405 = vpop.permute.xlu0 %404
        %406 = vrot.lane.b32.xlu0 %v367, 4
        %v407 = vpop.permute.xlu0 %406
        %408 = vrot.lane.b32.xlu0 %v368, 4
        %v409 = vpop.permute.xlu0 %408
        %410 = vrot.lane.b32.xlu0 %v369, 4
        %v411 = vpop.permute.xlu0 %410
        %412 = vrot.lane.b32.xlu0 %v370, 4
        %v413 = vpop.permute.xlu0 %412
        %414 = vrot.lane.b32.xlu0 %v371, 4
        %v415 = vpop.permute.xlu0 %414
        %416 = vrot.lane.b32.xlu0 %v372, 4
        %v417 = vpop.permute.xlu0 %416
        %418 = vrot.lane.b32.xlu0 %v373, 4
        %v419 = vpop.permute.xlu0 %418
        %420 = vrot.lane.b32.xlu0 %v374, 4
        %v421 = vpop.permute.xlu0 %420
        %422 = vrot.lane.b32.xlu0 %v375, 4
        %v423 = vpop.permute.xlu0 %422
        %vm440 = vcmask 64544
        %441 = vst.msk [vmem:[#allocation3] sm:$0xff] %vm440, %v393
        %442 = vst.msk [vmem:[#allocation3 + $0x8] sm:$0xff] %vm440, %v395
        %443 = vst.msk [vmem:[#allocation3 + $0x10] sm:$0xff] %vm440, %v397
        %444 = vst.msk [vmem:[#allocation3 + $0x18] sm:$0xff] %vm440, %v399
        %445 = vst.msk [vmem:[#allocation3 + $0x20] sm:$0xff] %vm440, %v401
        %446 = vst.msk [vmem:[#allocation3 + $0x28] sm:$0xff] %vm440, %v403
        %447 = vst.msk [vmem:[#allocation3 + $0x30] sm:$0xff] %vm440, %v405
        %448 = vst.msk [vmem:[#allocation3 + $0x38] sm:$0xff] %vm440, %v407
        %449 = vst.msk [vmem:[#allocation3 + $0x40] sm:$0xff] %vm440, %v409
        %450 = vst.msk [vmem:[#allocation3 + $0x48] sm:$0xff] %vm440, %v411
        %451 = vst.msk [vmem:[#allocation3 + $0x50] sm:$0xff] %vm440, %v413
        %452 = vst.msk [vmem:[#allocation3 + $0x58] sm:$0xff] %vm440, %v415
        %453 = vst.msk [vmem:[#allocation3 + $0x60] sm:$0xff] %vm440, %v417
        %454 = vst.msk [vmem:[#allocation3 + $0x68] sm:$0xff] %vm440, %v419
        %455 = vst.msk [vmem:[#allocation3 + $0x70] sm:$0xff] %vm440, %v421
        %456 = vst.msk [vmem:[#allocation3 + $0x78] sm:$0xff] %vm440, %v423
        %v457 = vld [vmem:[#allocation2 + $0x2] sm:$0xff]
        %v458 = vld [vmem:[#allocation2 + $0xa] sm:$0xff]
        %v459 = vld [vmem:[#allocation2 + $0x1a] sm:$0xff]
        %v460 = vld [vmem:[#allocation2 + $0x22] sm:$0xff]
        %v461 = vld [vmem:[#allocation2 + $0x32] sm:$0xff]
        %v462 = vld [vmem:[#allocation2 + $0x3a] sm:$0xff]
        %v463 = vld [vmem:[#allocation2 + $0x4a] sm:$0xff]
        %v464 = vld [vmem:[#allocation2 + $0x52] sm:$0xff]
        %v465 = vld [vmem:[#allocation2 + $0x62] sm:$0xff]
        %v466 = vld [vmem:[#allocation2 + $0x6a] sm:$0xff]
        %v467 = vld [vmem:[#allocation2 + $0x7a] sm:$0xff]
        %v468 = vld [vmem:[#allocation2 + $0x82] sm:$0xff]
        %v469 = vld [vmem:[#allocation2 + $0x92] sm:$0xff]
        %v470 = vld [vmem:[#allocation2 + $0x9a] sm:$0xff]
        %v471 = vld [vmem:[#allocation2 + $0xaa] sm:$0xff]
        %v472 = vld [vmem:[#allocation2 + $0xb2] sm:$0xff]
        %489 = vrot.lane.b32.xlu0 %v457, 8
        %v490 = vpop.permute.xlu0 %489
        %491 = vrot.lane.b32.xlu0 %v458, 8
        %v492 = vpop.permute.xlu0 %491
        %493 = vrot.lane.b32.xlu0 %v459, 8
        %v494 = vpop.permute.xlu0 %493
        %495 = vrot.lane.b32.xlu0 %v460, 8
        %v496 = vpop.permute.xlu0 %495
        %497 = vrot.lane.b32.xlu0 %v461, 8
        %v498 = vpop.permute.xlu0 %497
        %499 = vrot.lane.b32.xlu0 %v462, 8
        %v500 = vpop.permute.xlu0 %499
        %501 = vrot.lane.b32.xlu0 %v463, 8
        %v502 = vpop.permute.xlu0 %501
        %503 = vrot.lane.b32.xlu0 %v464, 8
        %v504 = vpop.permute.xlu0 %503
        %505 = vrot.lane.b32.xlu0 %v465, 8
        %v506 = vpop.permute.xlu0 %505
        %507 = vrot.lane.b32.xlu0 %v466, 8
        %v508 = vpop.permute.xlu0 %507
        %509 = vrot.lane.b32.xlu0 %v467, 8
        %v510 = vpop.permute.xlu0 %509
        %511 = vrot.lane.b32.xlu0 %v468, 8
        %v512 = vpop.permute.xlu0 %511
        %513 = vrot.lane.b32.xlu0 %v469, 8
        %v514 = vpop.permute.xlu0 %513
        %515 = vrot.lane.b32.xlu0 %v470, 8
        %v516 = vpop.permute.xlu0 %515
        %517 = vrot.lane.b32.xlu0 %v471, 8
        %v518 = vpop.permute.xlu0 %517
        %519 = vrot.lane.b32.xlu0 %v472, 8
        %v520 = vpop.permute.xlu0 %519
        %vm537 = vcmask 97344
        %538 = vst.msk [vmem:[#allocation3] sm:$0xff] %vm537, %v490
        %539 = vst.msk [vmem:[#allocation3 + $0x8] sm:$0xff] %vm537, %v492
        %540 = vst.msk [vmem:[#allocation3 + $0x10] sm:$0xff] %vm537, %v494
        %541 = vst.msk [vmem:[#allocation3 + $0x18] sm:$0xff] %vm537, %v496
        %542 = vst.msk [vmem:[#allocation3 + $0x20] sm:$0xff] %vm537, %v498
        %543 = vst.msk [vmem:[#allocation3 + $0x28] sm:$0xff] %vm537, %v500
        %544 = vst.msk [vmem:[#allocation3 + $0x30] sm:$0xff] %vm537, %v502
        %545 = vst.msk [vmem:[#allocation3 + $0x38] sm:$0xff] %vm537, %v504
        %546 = vst.msk [vmem:[#allocation3 + $0x40] sm:$0xff] %vm537, %v506
        %547 = vst.msk [vmem:[#allocation3 + $0x48] sm:$0xff] %vm537, %v508
        %548 = vst.msk [vmem:[#allocation3 + $0x50] sm:$0xff] %vm537, %v510
        %549 = vst.msk [vmem:[#allocation3 + $0x58] sm:$0xff] %vm537, %v512
        %550 = vst.msk [vmem:[#allocation3 + $0x60] sm:$0xff] %vm537, %v514
        %551 = vst.msk [vmem:[#allocation3 + $0x68] sm:$0xff] %vm537, %v516
        %552 = vst.msk [vmem:[#allocation3 + $0x70] sm:$0xff] %vm537, %v518
        %553 = vst.msk [vmem:[#allocation3 + $0x78] sm:$0xff] %vm537, %v520
        %s554 = scalar_lea.vmem [#allocation2], 24
        %v555 = vld [vmem:[%s554] sm:$0xff]
        %v556 = vld [vmem:[%s554 + $0x8] sm:$0xff]
        %v557 = vld [vmem:[%s554 + $0x18] sm:$0xff]
        %v558 = vld [vmem:[%s554 + $0x20] sm:$0xff]
        %v559 = vld [vmem:[%s554 + $0x30] sm:$0xff]
        %v560 = vld [vmem:[%s554 + $0x38] sm:$0xff]
        %v561 = vld [vmem:[%s554 + $0x48] sm:$0xff]
        %v562 = vld [vmem:[%s554 + $0x50] sm:$0xff]
        %v563 = vld [vmem:[%s554 + $0x60] sm:$0xff]
        %v564 = vld [vmem:[%s554 + $0x68] sm:$0xff]
        %v565 = vld [vmem:[%s554 + $0x78] sm:$0xff]
        %v566 = vld [vmem:[%s554 + $0x80] sm:$0xff]
        %v567 = vld [vmem:[%s554 + $0x90] sm:$0xff]
        %v568 = vld [vmem:[%s554 + $0x98] sm:$0xff]
        %v569 = vld [vmem:[%s554 + $0xa8] sm:$0xff]
        %v570 = vld [vmem:[%s554 + $0xb0] sm:$0xff]
        %587 = vrot.lane.b32.xlu0 %v555, 12
        %v588 = vpop.permute.xlu0 %587
        %589 = vrot.lane.b32.xlu0 %v556, 12
        %v590 = vpop.permute.xlu0 %589
        %591 = vrot.lane.b32.xlu0 %v557, 12
        %v592 = vpop.permute.xlu0 %591
        %593 = vrot.lane.b32.xlu0 %v558, 12
        %v594 = vpop.permute.xlu0 %593
        %595 = vrot.lane.b32.xlu0 %v559, 12
        %v596 = vpop.permute.xlu0 %595
        %597 = vrot.lane.b32.xlu0 %v560, 12
        %v598 = vpop.permute.xlu0 %597
        %599 = vrot.lane.b32.xlu0 %v561, 12
        %v600 = vpop.permute.xlu0 %599
        %601 = vrot.lane.b32.xlu0 %v562, 12
        %v602 = vpop.permute.xlu0 %601
        %603 = vrot.lane.b32.xlu0 %v563, 12
        %v604 = vpop.permute.xlu0 %603
        %605 = vrot.lane.b32.xlu0 %v564, 12
        %v606 = vpop.permute.xlu0 %605
        %607 = vrot.lane.b32.xlu0 %v565, 12
        %v608 = vpop.permute.xlu0 %607
        %609 = vrot.lane.b32.xlu0 %v566, 12
        %v610 = vpop.permute.xlu0 %609
        %611 = vrot.lane.b32.xlu0 %v567, 12
        %v612 = vpop.permute.xlu0 %611
        %613 = vrot.lane.b32.xlu0 %v568, 12
        %v614 = vpop.permute.xlu0 %613
        %615 = vrot.lane.b32.xlu0 %v569, 12
        %v616 = vpop.permute.xlu0 %615
        %617 = vrot.lane.b32.xlu0 %v570, 12
        %v618 = vpop.permute.xlu0 %617
        %vm635 = vcmask 130144
        %636 = vst.msk [vmem:[#allocation3] sm:$0xff] %vm635, %v588
        %637 = vst.msk [vmem:[#allocation3 + $0x8] sm:$0xff] %vm635, %v590
        %638 = vst.msk [vmem:[#allocation3 + $0x10] sm:$0xff] %vm635, %v592
        %639 = vst.msk [vmem:[#allocation3 + $0x18] sm:$0xff] %vm635, %v594
        %640 = vst.msk [vmem:[#allocation3 + $0x20] sm:$0xff] %vm635, %v596
        %641 = vst.msk [vmem:[#allocation3 + $0x28] sm:$0xff] %vm635, %v598
        %642 = vst.msk [vmem:[#allocation3 + $0x30] sm:$0xff] %vm635, %v600
        %643 = vst.msk [vmem:[#allocation3 + $0x38] sm:$0xff] %vm635, %v602
        %644 = vst.msk [vmem:[#allocation3 + $0x40] sm:$0xff] %vm635, %v604
        %645 = vst.msk [vmem:[#allocation3 + $0x48] sm:$0xff] %vm635, %v606
        %646 = vst.msk [vmem:[#allocation3 + $0x50] sm:$0xff] %vm635, %v608
        %647 = vst.msk [vmem:[#allocation3 + $0x58] sm:$0xff] %vm635, %v610
        %648 = vst.msk [vmem:[#allocation3 + $0x60] sm:$0xff] %vm635, %v612
        %649 = vst.msk [vmem:[#allocation3 + $0x68] sm:$0xff] %vm635, %v614
        %650 = vst.msk [vmem:[#allocation3 + $0x70] sm:$0xff] %vm635, %v616
        %651 = vst.msk [vmem:[#allocation3 + $0x78] sm:$0xff] %vm635, %v618
        %v652 = vld [vmem:[%s554 + $0x1] sm:$0xff]
        %v653 = vld [vmem:[%s554 + $0x9] sm:$0xff]
        %v654 = vld [vmem:[%s554 + $0x19] sm:$0xff]
        %v655 = vld [vmem:[%s554 + $0x21] sm:$0xff]
        %v656 = vld [vmem:[%s554 + $0x31] sm:$0xff]
        %v657 = vld [vmem:[%s554 + $0x39] sm:$0xff]
        %v658 = vld [vmem:[%s554 + $0x49] sm:$0xff]
        %v659 = vld [vmem:[%s554 + $0x51] sm:$0xff]
        %v660 = vld [vmem:[%s554 + $0x61] sm:$0xff]
        %v661 = vld [vmem:[%s554 + $0x69] sm:$0xff]
        %v662 = vld [vmem:[%s554 + $0x79] sm:$0xff]
        %v663 = vld [vmem:[%s554 + $0x81] sm:$0xff]
        %v664 = vld [vmem:[%s554 + $0x91] sm:$0xff]
        %v665 = vld [vmem:[%s554 + $0x99] sm:$0xff]
        %v666 = vld [vmem:[%s554 + $0xa9] sm:$0xff]
        %v667 = vld [vmem:[%s554 + $0xb1] sm:$0xff]
        %684 = vrot.lane.b32.xlu0 %v652, 16
        %v685 = vpop.permute.xlu0 %684
        %686 = vrot.lane.b32.xlu0 %v653, 16
        %v687 = vpop.permute.xlu0 %686
        %688 = vrot.lane.b32.xlu0 %v654, 16
        %v689 = vpop.permute.xlu0 %688
        %690 = vrot.lane.b32.xlu0 %v655, 16
        %v691 = vpop.permute.xlu0 %690
        %692 = vrot.lane.b32.xlu0 %v656, 16
        %v693 = vpop.permute.xlu0 %692
        %694 = vrot.lane.b32.xlu0 %v657, 16
        %v695 = vpop.permute.xlu0 %694
        %696 = vrot.lane.b32.xlu0 %v658, 16
        %v697 = vpop.permute.xlu0 %696
        %698 = vrot.lane.b32.xlu0 %v659, 16
        %v699 = vpop.permute.xlu0 %698
        %700 = vrot.lane.b32.xlu0 %v660, 16
        %v701 = vpop.permute.xlu0 %700
        %702 = vrot.lane.b32.xlu0 %v661, 16
        %v703 = vpop.permute.xlu0 %702
        %704 = vrot.lane.b32.xlu0 %v662, 16
        %v705 = vpop.permute.xlu0 %704
        %706 = vrot.lane.b32.xlu0 %v663, 16
        %v707 = vpop.permute.xlu0 %706
        %708 = vrot.lane.b32.xlu0 %v664, 16
        %v709 = vpop.permute.xlu0 %708
        %710 = vrot.lane.b32.xlu0 %v665, 16
        %v711 = vpop.permute.xlu0 %710
        %712 = vrot.lane.b32.xlu0 %v666, 16
        %v713 = vpop.permute.xlu0 %712
        %714 = vrot.lane.b32.xlu0 %v667, 16
        %v715 = vpop.permute.xlu0 %714
        %vm732 = vcmask 162944
        %733 = vst.msk [vmem:[#allocation3] sm:$0xff] %vm732, %v685
        %734 = vst.msk [vmem:[#allocation3 + $0x8] sm:$0xff] %vm732, %v687
        %735 = vst.msk [vmem:[#allocation3 + $0x10] sm:$0xff] %vm732, %v689
        %736 = vst.msk [vmem:[#allocation3 + $0x18] sm:$0xff] %vm732, %v691
        %737 = vst.msk [vmem:[#allocation3 + $0x20] sm:$0xff] %vm732, %v693
        %738 = vst.msk [vmem:[#allocation3 + $0x28] sm:$0xff] %vm732, %v695
        %739 = vst.msk [vmem:[#allocation3 + $0x30] sm:$0xff] %vm732, %v697
        %740 = vst.msk [vmem:[#allocation3 + $0x38] sm:$0xff] %vm732, %v699
        %741 = vst.msk [vmem:[#allocation3 + $0x40] sm:$0xff] %vm732, %v701
        %742 = vst.msk [vmem:[#allocation3 + $0x48] sm:$0xff] %vm732, %v703
        %743 = vst.msk [vmem:[#allocation3 + $0x50] sm:$0xff] %vm732, %v705
        %744 = vst.msk [vmem:[#allocation3 + $0x58] sm:$0xff] %vm732, %v707
        %745 = vst.msk [vmem:[#allocation3 + $0x60] sm:$0xff] %vm732, %v709
        %746 = vst.msk [vmem:[#allocation3 + $0x68] sm:$0xff] %vm732, %v711
        %747 = vst.msk [vmem:[#allocation3 + $0x70] sm:$0xff] %vm732, %v713
        %748 = vst.msk [vmem:[#allocation3 + $0x78] sm:$0xff] %vm732, %v715
        %v749 = vld [vmem:[%s554 + $0x2] sm:$0xff]
        %v750 = vld [vmem:[%s554 + $0xa] sm:$0xff]
        %v751 = vld [vmem:[%s554 + $0x1a] sm:$0xff]
        %v752 = vld [vmem:[%s554 + $0x22] sm:$0xff]
        %v753 = vld [vmem:[%s554 + $0x32] sm:$0xff]
        %v754 = vld [vmem:[%s554 + $0x3a] sm:$0xff]
        %v755 = vld [vmem:[%s554 + $0x4a] sm:$0xff]
        %v756 = vld [vmem:[%s554 + $0x52] sm:$0xff]
        %v757 = vld [vmem:[%s554 + $0x62] sm:$0xff]
        %v758 = vld [vmem:[%s554 + $0x6a] sm:$0xff]
        %v759 = vld [vmem:[%s554 + $0x7a] sm:$0xff]
        %v760 = vld [vmem:[%s554 + $0x82] sm:$0xff]
        %v761 = vld [vmem:[%s554 + $0x92] sm:$0xff]
        %v762 = vld [vmem:[%s554 + $0x9a] sm:$0xff]
        %v763 = vld [vmem:[%s554 + $0xaa] sm:$0xff]
        %v764 = vld [vmem:[%s554 + $0xb2] sm:$0xff]
        %781 = vrot.lane.b32.xlu0 %v749, 20
        %v782 = vpop.permute.xlu0 %781
        %783 = vrot.lane.b32.xlu0 %v750, 20
        %v784 = vpop.permute.xlu0 %783
        %785 = vrot.lane.b32.xlu0 %v751, 20
        %v786 = vpop.permute.xlu0 %785
        %787 = vrot.lane.b32.xlu0 %v752, 20
        %v788 = vpop.permute.xlu0 %787
        %789 = vrot.lane.b32.xlu0 %v753, 20
        %v790 = vpop.permute.xlu0 %789
        %791 = vrot.lane.b32.xlu0 %v754, 20
        %v792 = vpop.permute.xlu0 %791
        %793 = vrot.lane.b32.xlu0 %v755, 20
        %v794 = vpop.permute.xlu0 %793
        %795 = vrot.lane.b32.xlu0 %v756, 20
        %v796 = vpop.permute.xlu0 %795
        %797 = vrot.lane.b32.xlu0 %v757, 20
        %v798 = vpop.permute.xlu0 %797
        %799 = vrot.lane.b32.xlu0 %v758, 20
        %v800 = vpop.permute.xlu0 %799
        %801 = vrot.lane.b32.xlu0 %v759, 20
        %v802 = vpop.permute.xlu0 %801
        %803 = vrot.lane.b32.xlu0 %v760, 20
        %v804 = vpop.permute.xlu0 %803
        %805 = vrot.lane.b32.xlu0 %v761, 20
        %v806 = vpop.permute.xlu0 %805
        %807 = vrot.lane.b32.xlu0 %v762, 20
        %v808 = vpop.permute.xlu0 %807
        %809 = vrot.lane.b32.xlu0 %v763, 20
        %v810 = vpop.permute.xlu0 %809
        %811 = vrot.lane.b32.xlu0 %v764, 20
        %v812 = vpop.permute.xlu0 %811
        %vm829 = vcmask 195744
        %830 = vst.msk [vmem:[#allocation3] sm:$0xff] %vm829, %v782
        %831 = vst.msk [vmem:[#allocation3 + $0x8] sm:$0xff] %vm829, %v784
        %832 = vst.msk [vmem:[#allocation3 + $0x10] sm:$0xff] %vm829, %v786
        %833 = vst.msk [vmem:[#allocation3 + $0x18] sm:$0xff] %vm829, %v788
        %834 = vst.msk [vmem:[#allocation3 + $0x20] sm:$0xff] %vm829, %v790
        %835 = vst.msk [vmem:[#allocation3 + $0x28] sm:$0xff] %vm829, %v792
        %836 = vst.msk [vmem:[#allocation3 + $0x30] sm:$0xff] %vm829, %v794
        %837 = vst.msk [vmem:[#allocation3 + $0x38] sm:$0xff] %vm829, %v796
        %838 = vst.msk [vmem:[#allocation3 + $0x40] sm:$0xff] %vm829, %v798
        %839 = vst.msk [vmem:[#allocation3 + $0x48] sm:$0xff] %vm829, %v800
        %840 = vst.msk [vmem:[#allocation3 + $0x50] sm:$0xff] %vm829, %v802
        %841 = vst.msk [vmem:[#allocation3 + $0x58] sm:$0xff] %vm829, %v804
        %842 = vst.msk [vmem:[#allocation3 + $0x60] sm:$0xff] %vm829, %v806
        %843 = vst.msk [vmem:[#allocation3 + $0x68] sm:$0xff] %vm829, %v808
        %844 = vst.msk [vmem:[#allocation3 + $0x70] sm:$0xff] %vm829, %v810
        %845 = vst.msk [vmem:[#allocation3 + $0x78] sm:$0xff] %vm829, %v812
        %s846 = scalar_lea.vmem [#allocation2], 48
        %v847 = vld [vmem:[%s846] sm:$0xff]
        %v848 = vld [vmem:[%s846 + $0x8] sm:$0xff]
        %v849 = vld [vmem:[%s846 + $0x18] sm:$0xff]
        %v850 = vld [vmem:[%s846 + $0x20] sm:$0xff]
        %v851 = vld [vmem:[%s846 + $0x30] sm:$0xff]
        %v852 = vld [vmem:[%s846 + $0x38] sm:$0xff]
        %v853 = vld [vmem:[%s846 + $0x48] sm:$0xff]
        %v854 = vld [vmem:[%s846 + $0x50] sm:$0xff]
        %v855 = vld [vmem:[%s846 + $0x60] sm:$0xff]
        %v856 = vld [vmem:[%s846 + $0x68] sm:$0xff]
        %v857 = vld [vmem:[%s846 + $0x78] sm:$0xff]
        %v858 = vld [vmem:[%s846 + $0x80] sm:$0xff]
        %v859 = vld [vmem:[%s846 + $0x90] sm:$0xff]
        %v860 = vld [vmem:[%s846 + $0x98] sm:$0xff]
        %v861 = vld [vmem:[%s846 + $0xa8] sm:$0xff]
        %v862 = vld [vmem:[%s846 + $0xb0] sm:$0xff]
        %879 = vrot.lane.b32.xlu0 %v847, 24
        %v880 = vpop.permute.xlu0 %879
        %881 = vrot.lane.b32.xlu0 %v848, 24
        %v882 = vpop.permute.xlu0 %881
        %883 = vrot.lane.b32.xlu0 %v849, 24
        %v884 = vpop.permute.xlu0 %883
        %885 = vrot.lane.b32.xlu0 %v850, 24
        %v886 = vpop.permute.xlu0 %885
        %887 = vrot.lane.b32.xlu0 %v851, 24
        %v888 = vpop.permute.xlu0 %887
        %889 = vrot.lane.b32.xlu0 %v852, 24
        %v890 = vpop.permute.xlu0 %889
        %891 = vrot.lane.b32.xlu0 %v853, 24
        %v892 = vpop.permute.xlu0 %891
        %893 = vrot.lane.b32.xlu0 %v854, 24
        %v894 = vpop.permute.xlu0 %893
        %895 = vrot.lane.b32.xlu0 %v855, 24
        %v896 = vpop.permute.xlu0 %895
        %897 = vrot.lane.b32.xlu0 %v856, 24
        %v898 = vpop.permute.xlu0 %897
        %899 = vrot.lane.b32.xlu0 %v857, 24
        %v900 = vpop.permute.xlu0 %899
        %901 = vrot.lane.b32.xlu0 %v858, 24
        %v902 = vpop.permute.xlu0 %901
        %903 = vrot.lane.b32.xlu0 %v859, 24
        %v904 = vpop.permute.xlu0 %903
        %905 = vrot.lane.b32.xlu0 %v860, 24
        %v906 = vpop.permute.xlu0 %905
        %907 = vrot.lane.b32.xlu0 %v861, 24
        %v908 = vpop.permute.xlu0 %907
        %909 = vrot.lane.b32.xlu0 %v862, 24
        %v910 = vpop.permute.xlu0 %909
        %vm927 = vcmask 228544
        %928 = vst.msk [vmem:[#allocation3] sm:$0xff] %vm927, %v880
        %929 = vst.msk [vmem:[#allocation3 + $0x8] sm:$0xff] %vm927, %v882
        %930 = vst.msk [vmem:[#allocation3 + $0x10] sm:$0xff] %vm927, %v884
        %931 = vst.msk [vmem:[#allocation3 + $0x18] sm:$0xff] %vm927, %v886
        %932 = vst.msk [vmem:[#allocation3 + $0x20] sm:$0xff] %vm927, %v888
        %933 = vst.msk [vmem:[#allocation3 + $0x28] sm:$0xff] %vm927, %v890
        %934 = vst.msk [vmem:[#allocation3 + $0x30] sm:$0xff] %vm927, %v892
        %935 = vst.msk [vmem:[#allocation3 + $0x38] sm:$0xff] %vm927, %v894
        %936 = vst.msk [vmem:[#allocation3 + $0x40] sm:$0xff] %vm927, %v896
        %937 = vst.msk [vmem:[#allocation3 + $0x48] sm:$0xff] %vm927, %v898
        %938 = vst.msk [vmem:[#allocation3 + $0x50] sm:$0xff] %vm927, %v900
        %939 = vst.msk [vmem:[#allocation3 + $0x58] sm:$0xff] %vm927, %v902
        %940 = vst.msk [vmem:[#allocation3 + $0x60] sm:$0xff] %vm927, %v904
        %941 = vst.msk [vmem:[#allocation3 + $0x68] sm:$0xff] %vm927, %v906
        %942 = vst.msk [vmem:[#allocation3 + $0x70] sm:$0xff] %vm927, %v908
        %943 = vst.msk [vmem:[#allocation3 + $0x78] sm:$0xff] %vm927, %v910
        %v944 = vld [vmem:[%s846 + $0x1] sm:$0xff]
        %v945 = vld [vmem:[%s846 + $0x9] sm:$0xff]
        %v946 = vld [vmem:[%s846 + $0x19] sm:$0xff]
        %v947 = vld [vmem:[%s846 + $0x21] sm:$0xff]
        %v948 = vld [vmem:[%s846 + $0x31] sm:$0xff]
        %v949 = vld [vmem:[%s846 + $0x39] sm:$0xff]
        %v950 = vld [vmem:[%s846 + $0x49] sm:$0xff]
        %v951 = vld [vmem:[%s846 + $0x51] sm:$0xff]
        %v952 = vld [vmem:[%s846 + $0x61] sm:$0xff]
        %v953 = vld [vmem:[%s846 + $0x69] sm:$0xff]
        %v954 = vld [vmem:[%s846 + $0x79] sm:$0xff]
        %v955 = vld [vmem:[%s846 + $0x81] sm:$0xff]
        %v956 = vld [vmem:[%s846 + $0x91] sm:$0xff]
        %v957 = vld [vmem:[%s846 + $0x99] sm:$0xff]
        %v958 = vld [vmem:[%s846 + $0xa9] sm:$0xff]
        %v959 = vld [vmem:[%s846 + $0xb1] sm:$0xff]
        %976 = vrot.lane.b32.xlu0 %v944, 28
        %v977 = vpop.permute.xlu0 %976
        %978 = vrot.lane.b32.xlu0 %v945, 28
        %v979 = vpop.permute.xlu0 %978
        %980 = vrot.lane.b32.xlu0 %v946, 28
        %v981 = vpop.permute.xlu0 %980
        %982 = vrot.lane.b32.xlu0 %v947, 28
        %v983 = vpop.permute.xlu0 %982
        %984 = vrot.lane.b32.xlu0 %v948, 28
        %v985 = vpop.permute.xlu0 %984
        %986 = vrot.lane.b32.xlu0 %v949, 28
        %v987 = vpop.permute.xlu0 %986
        %988 = vrot.lane.b32.xlu0 %v950, 28
        %v989 = vpop.permute.xlu0 %988
        %990 = vrot.lane.b32.xlu0 %v951, 28
        %v991 = vpop.permute.xlu0 %990
        %992 = vrot.lane.b32.xlu0 %v952, 28
        %v993 = vpop.permute.xlu0 %992
        %994 = vrot.lane.b32.xlu0 %v953, 28
        %v995 = vpop.permute.xlu0 %994
        %996 = vrot.lane.b32.xlu0 %v954, 28
        %v997 = vpop.permute.xlu0 %996
        %998 = vrot.lane.b32.xlu0 %v955, 28
        %v999 = vpop.permute.xlu0 %998
        %1000 = vrot.lane.b32.xlu0 %v956, 28
        %v1001 = vpop.permute.xlu0 %1000
        %1002 = vrot.lane.b32.xlu0 %v957, 28
        %v1003 = vpop.permute.xlu0 %1002
        %1004 = vrot.lane.b32.xlu0 %v958, 28
        %v1005 = vpop.permute.xlu0 %1004
        %1006 = vrot.lane.b32.xlu0 %v959, 28
        %v1007 = vpop.permute.xlu0 %1006
        %vm1024 = vcmask 261344
        %1025 = vst.msk [vmem:[#allocation3] sm:$0xff] %vm1024, %v977
        %1026 = vst.msk [vmem:[#allocation3 + $0x8] sm:$0xff] %vm1024, %v979
        %1027 = vst.msk [vmem:[#allocation3 + $0x10] sm:$0xff] %vm1024, %v981
        %1028 = vst.msk [vmem:[#allocation3 + $0x18] sm:$0xff] %vm1024, %v983
        %1029 = vst.msk [vmem:[#allocation3 + $0x20] sm:$0xff] %vm1024, %v985
        %1030 = vst.msk [vmem:[#allocation3 + $0x28] sm:$0xff] %vm1024, %v987
        %1031 = vst.msk [vmem:[#allocation3 + $0x30] sm:$0xff] %vm1024, %v989
        %1032 = vst.msk [vmem:[#allocation3 + $0x38] sm:$0xff] %vm1024, %v991
        %1033 = vst.msk [vmem:[#allocation3 + $0x40] sm:$0xff] %vm1024, %v993
        %1034 = vst.msk [vmem:[#allocation3 + $0x48] sm:$0xff] %vm1024, %v995
        %1035 = vst.msk [vmem:[#allocation3 + $0x50] sm:$0xff] %vm1024, %v997
        %1036 = vst.msk [vmem:[#allocation3 + $0x58] sm:$0xff] %vm1024, %v999
        %1037 = vst.msk [vmem:[#allocation3 + $0x60] sm:$0xff] %vm1024, %v1001
        %1038 = vst.msk [vmem:[#allocation3 + $0x68] sm:$0xff] %vm1024, %v1003
        %1039 = vst.msk [vmem:[#allocation3 + $0x70] sm:$0xff] %vm1024, %v1005
        %1040 = vst.msk [vmem:[#allocation3 + $0x78] sm:$0xff] %vm1024, %v1007
        %v1041 = vld [vmem:[%s846 + $0x2] sm:$0xff]
        %v1042 = vld [vmem:[%s846 + $0xa] sm:$0xff]
        %v1043 = vld [vmem:[%s846 + $0x1a] sm:$0xff]
        %v1044 = vld [vmem:[%s846 + $0x22] sm:$0xff]
        %v1045 = vld [vmem:[%s846 + $0x32] sm:$0xff]
        %v1046 = vld [vmem:[%s846 + $0x3a] sm:$0xff]
        %v1047 = vld [vmem:[%s846 + $0x4a] sm:$0xff]
        %v1048 = vld [vmem:[%s846 + $0x52] sm:$0xff]
        %v1049 = vld [vmem:[%s846 + $0x62] sm:$0xff]
        %v1050 = vld [vmem:[%s846 + $0x6a] sm:$0xff]
        %v1051 = vld [vmem:[%s846 + $0x7a] sm:$0xff]
        %v1052 = vld [vmem:[%s846 + $0x82] sm:$0xff]
        %v1053 = vld [vmem:[%s846 + $0x92] sm:$0xff]
        %v1054 = vld [vmem:[%s846 + $0x9a] sm:$0xff]
        %v1055 = vld [vmem:[%s846 + $0xaa] sm:$0xff]
        %v1056 = vld [vmem:[%s846 + $0xb2] sm:$0xff]
        %1073 = vrot.lane.b32.xlu0 %v1041, 32
        %v1074 = vpop.permute.xlu0 %1073
        %1075 = vrot.lane.b32.xlu0 %v1042, 32
        %v1076 = vpop.permute.xlu0 %1075
        %1077 = vrot.lane.b32.xlu0 %v1043, 32
        %v1078 = vpop.permute.xlu0 %1077
        %1079 = vrot.lane.b32.xlu0 %v1044, 32
        %v1080 = vpop.permute.xlu0 %1079
        %1081 = vrot.lane.b32.xlu0 %v1045, 32
        %v1082 = vpop.permute.xlu0 %1081
        %1083 = vrot.lane.b32.xlu0 %v1046, 32
        %v1084 = vpop.permute.xlu0 %1083
        %1085 = vrot.lane.b32.xlu0 %v1047, 32
        %v1086 = vpop.permute.xlu0 %1085
        %1087 = vrot.lane.b32.xlu0 %v1048, 32
        %v1088 = vpop.permute.xlu0 %1087
        %1089 = vrot.lane.b32.xlu0 %v1049, 32
        %v1090 = vpop.permute.xlu0 %1089
        %1091 = vrot.lane.b32.xlu0 %v1050, 32
        %v1092 = vpop.permute.xlu0 %1091
        %1093 = vrot.lane.b32.xlu0 %v1051, 32
        %v1094 = vpop.permute.xlu0 %1093
        %1095 = vrot.lane.b32.xlu0 %v1052, 32
        %v1096 = vpop.permute.xlu0 %1095
        %1097 = vrot.lane.b32.xlu0 %v1053, 32
        %v1098 = vpop.permute.xlu0 %1097
        %1099 = vrot.lane.b32.xlu0 %v1054, 32
        %v1100 = vpop.permute.xlu0 %1099
        %1101 = vrot.lane.b32.xlu0 %v1055, 32
        %v1102 = vpop.permute.xlu0 %1101
        %1103 = vrot.lane.b32.xlu0 %v1056, 32
        %v1104 = vpop.permute.xlu0 %1103
        %vm1121 = vcmask 294144
        %1122 = vst.msk [vmem:[#allocation3] sm:$0xff] %vm1121, %v1074
        %1123 = vst.msk [vmem:[#allocation3 + $0x8] sm:$0xff] %vm1121, %v1076
        %1124 = vst.msk [vmem:[#allocation3 + $0x10] sm:$0xff] %vm1121, %v1078
        %1125 = vst.msk [vmem:[#allocation3 + $0x18] sm:$0xff] %vm1121, %v1080
        %1126 = vst.msk [vmem:[#allocation3 + $0x20] sm:$0xff] %vm1121, %v1082
        %1127 = vst.msk [vmem:[#allocation3 + $0x28] sm:$0xff] %vm1121, %v1084
        %1128 = vst.msk [vmem:[#allocation3 + $0x30] sm:$0xff] %vm1121, %v1086
        %1129 = vst.msk [vmem:[#allocation3 + $0x38] sm:$0xff] %vm1121, %v1088
        %1130 = vst.msk [vmem:[#allocation3 + $0x40] sm:$0xff] %vm1121, %v1090
        %1131 = vst.msk [vmem:[#allocation3 + $0x48] sm:$0xff] %vm1121, %v1092
        %1132 = vst.msk [vmem:[#allocation3 + $0x50] sm:$0xff] %vm1121, %v1094
        %1133 = vst.msk [vmem:[#allocation3 + $0x58] sm:$0xff] %vm1121, %v1096
        %1134 = vst.msk [vmem:[#allocation3 + $0x60] sm:$0xff] %vm1121, %v1098
        %1135 = vst.msk [vmem:[#allocation3 + $0x68] sm:$0xff] %vm1121, %v1100
        %1136 = vst.msk [vmem:[#allocation3 + $0x70] sm:$0xff] %vm1121, %v1102
        %1137 = vst.msk [vmem:[#allocation3 + $0x78] sm:$0xff] %vm1121, %v1104
        %v1138 = vld [vmem:[#allocation3] sm:$0xff]
        %v1139 = vld [vmem:[#allocation3 + $0x8] sm:$0xff]
        %v1140 = vld [vmem:[#allocation3 + $0x10] sm:$0xff]
        %v1141 = vld [vmem:[#allocation3 + $0x18] sm:$0xff]
        %v1142 = vld [vmem:[#allocation3 + $0x20] sm:$0xff]
        %v1143 = vld [vmem:[#allocation3 + $0x28] sm:$0xff]
        %v1144 = vld [vmem:[#allocation3 + $0x30] sm:$0xff]
        %v1145 = vld [vmem:[#allocation3 + $0x38] sm:$0xff]
        %v1146 = vld [vmem:[#allocation3 + $0x40] sm:$0xff]
        %v1147 = vld [vmem:[#allocation3 + $0x48] sm:$0xff]
        %v1148 = vld [vmem:[#allocation3 + $0x50] sm:$0xff]
        %v1149 = vld [vmem:[#allocation3 + $0x58] sm:$0xff]
        %v1150 = vld [vmem:[#allocation3 + $0x60] sm:$0xff]
        %v1151 = vld [vmem:[#allocation3 + $0x68] sm:$0xff]
        %v1152 = vld [vmem:[#allocation3 + $0x70] sm:$0xff]
        %v1153 = vld [vmem:[#allocation3 + $0x78] sm:$0xff]
        %v1154 = vld [vmem:[%s2] sm:$0xff]
        %v1155 = vld [vmem:[%s2 + $0x8] sm:$0xff]
        %v1156 = vld [vmem:[%s2 + $0x10] sm:$0xff]
        %v1157 = vld [vmem:[%s2 + $0x18] sm:$0xff]
        %v1158 = vld [vmem:[%s2 + $0x20] sm:$0xf]
        %v1159 = vld [vmem:[%s554 + $0x1] sm:$0xff]
        %v1160 = vld [vmem:[%s554 + $0x9] sm:$0xff]
        %v1161 = vld [vmem:[%s554 + $0x19] sm:$0xff]
        %v1162 = vld [vmem:[%s554 + $0x21] sm:$0xff]
        %v1163 = vld [vmem:[%s554 + $0x31] sm:$0xff]
        %v1164 = vld [vmem:[%s554 + $0x39] sm:$0xff]
        %v1165 = vld [vmem:[%s554 + $0x49] sm:$0xff]
        %v1166 = vld [vmem:[%s554 + $0x51] sm:$0xff]
        %v1167 = vld [vmem:[%s554 + $0x61] sm:$0xff]
        %v1168 = vld [vmem:[%s554 + $0x69] sm:$0xff]
        %v1169 = vld [vmem:[%s554 + $0x79] sm:$0xff]
        %v1170 = vld [vmem:[%s554 + $0x81] sm:$0xff]
        %v1171 = vld [vmem:[%s554 + $0x91] sm:$0xff]
        %v1172 = vld [vmem:[%s554 + $0x99] sm:$0xff]
        %v1173 = vld [vmem:[%s554 + $0xa9] sm:$0xff]
        %v1174 = vld [vmem:[%s554 + $0xb1] sm:$0xff]
        %vm1175 = vcmask 293888
        %v1177 = vsel %vm1175, %v1138, 0
        %v1180 = vsel %vm1175, %v1139, 0
        %v1183 = vsel %vm1175, %v1140, 0
        %v1186 = vsel %vm1175, %v1141, 0
        %v1189 = vsel %vm1175, %v1142, 0
        %v1192 = vsel %vm1175, %v1143, 0
        %v1195 = vsel %vm1175, %v1144, 0
        %v1198 = vsel %vm1175, %v1145, 0
        %v1201 = vsel %vm1175, %v1146, 0
        %v1204 = vsel %vm1175, %v1147, 0
        %v1207 = vsel %vm1175, %v1148, 0
        %v1210 = vsel %vm1175, %v1149, 0
        %v1213 = vsel %vm1175, %v1150, 0
        %v1216 = vsel %vm1175, %v1151, 0
        %v1219 = vsel %vm1175, %v1152, 0
        %v1222 = vsel %vm1175, %v1153, 0
        %vm1224 = vcmask 1043456
        %v1226 = vsel %vm1224, %v1158, 0
        %1228 = vmatprep.subr.mxu0 0.0
        %1229 = vmatpush1.msra.mxu0 %v1154
        %1230 = vmatprep.subr.mxu0 0.0
        %1231 = vmatpush1.msra.mxu0 %v1155
        %1232 = vmatprep.subr.mxu0 0.0
        %1233 = vmatpush1.msra.mxu0 %v1156
        %1234 = vmatprep.subr.mxu0 0.0
        %1235 = vmatpush1.msra.mxu0 %v1157
        %1236 = vmatprep.subr.mxu0 0.0
        %1237 = vmatpush1.msra.mxu0 %v1226
        %1238 = vmatprep.subr.mxu0 0.0
        %1239 = vmatpush1.msra.mxu0 0.0
        %1240 = vmatprep.subr.mxu0 0.0
        %1241 = vmatpush1.msra.mxu0 0.0
        %1242 = vmatprep.subr.mxu0 0.0
        %1243 = vmatpush1.msra.mxu0 0.0
        %1244 = vmatprep.subr.mxu0 0.0
        %1245 = vmatpush1.msra.mxu0 0.0
        %1246 = vmatprep.subr.mxu0 0.0
        %1247 = vmatpush1.msra.mxu0 0.0
        %1248 = vmatprep.subr.mxu0 0.0
        %1249 = vmatpush1.msra.mxu0 0.0
        %1250 = vmatprep.subr.mxu0 0.0
        %1251 = vmatpush1.msra.mxu0 0.0
        %1252 = vmatprep.subr.mxu0 0.0
        %1253 = vmatpush1.msra.mxu0 0.0
        %1254 = vmatprep.subr.mxu0 0.0
        %1255 = vmatpush1.msra.mxu0 0.0
        %1256 = vmatprep.subr.mxu0 0.0
        %1257 = vmatpush1.msra.mxu0 0.0
        %1258 = vmatprep.subr.mxu0 0.0
        %1259 = vmatpush1.msra.mxu0 0.0
        %1260 = vmatprep.subr.mxu0 0.0
        %1261 = vmatpush1.msra.mxu0 0.0
        %1262 = vmatprep.subr.mxu0 0.0
        %1263 = vmatpush1.msra.mxu0 0.0
        %1264 = vmatprep.subr.mxu0 0.0
        %1265 = vmatpush1.msra.mxu0 0.0
        %1266 = vmatprep.subr.mxu0 0.0
        %1267 = vmatpush1.msra.mxu0 0.0
        %1268 = vmatprep.subr.mxu0 0.0
        %1269 = vmatpush1.msra.mxu0 0.0
        %1270 = vmatprep.subr.mxu0 0.0
        %1271 = vmatpush1.msra.mxu0 0.0
        %1272 = vmatprep.subr.mxu0 0.0
        %1273 = vmatpush1.msra.mxu0 0.0
        %1274 = vmatprep.subr.mxu0 0.0
        %1275 = vmatpush1.msra.mxu0 0.0
        %1276 = vmatprep.subr.mxu0 0.0
        %1277 = vmatpush1.msra.mxu0 0.0
        %1278 = vmatprep.subr.mxu0 0.0
        %1279 = vmatpush1.msra.mxu0 0.0
        %1280 = vmatprep.subr.mxu0 0.0
        %1281 = vmatpush1.msra.mxu0 0.0
        %1282 = vmatprep.subr.mxu0 0.0
        %1283 = vmatpush1.msra.mxu0 0.0
        %1284 = vmatprep.subr.mxu0 0.0
        %1285 = vmatpush1.msra.mxu0 0.0
        %1286 = vmatprep.subr.mxu0 0.0
        %1287 = vmatpush1.msra.mxu0 0.0
        %1288 = vmatprep.subr.mxu0 0.0
        %1289 = vmatpush1.msra.mxu0 0.0
        %1290 = vmatprep.subr.mxu0 0.0
        %1291 = vmatpush1.msra.mxu0 0.0
        %1292 = vmatprep.mubr.f32.mxu0 0.0
        %1293 = vmatmul.mubr.f32.gmra.mrb[0].mxu0 %v1177
        %v1294 = vpop.f32.mrb[0].mxu0
        %v1295 = vadd.f32 %v1159, %v1294
        %v1296 = vpop.f32.mrb[0].mxu0
        %1297 = vmatprep.mubr.f32.mxu0 0.0
        %1298 = vmatmul.mubr.f32.gmra.mrb[0].mxu0 %v1180
        %v1299 = vpop.f32.mrb[0].mxu0
        %v1300 = vadd.f32 %v1160, %v1299
        %v1301 = vpop.f32.mrb[0].mxu0
        %1302 = vmatprep.mubr.f32.mxu0 0.0
        %1303 = vmatmul.mubr.f32.gmra.mrb[0].mxu0 %v1183
        %v1304 = vpop.f32.mrb[0].mxu0
        %v1305 = vadd.f32 %v1161, %v1304
        %v1306 = vpop.f32.mrb[0].mxu0
        %1307 = vmatprep.mubr.f32.mxu0 0.0
        %1308 = vmatmul.mubr.f32.gmra.mrb[0].mxu0 %v1186
        %v1309 = vpop.f32.mrb[0].mxu0
        %v1310 = vadd.f32 %v1162, %v1309
        %v1311 = vpop.f32.mrb[0].mxu0
        %1312 = vmatprep.mubr.f32.mxu0 0.0
        %1313 = vmatmul.mubr.f32.gmra.mrb[0].mxu0 %v1189
        %v1314 = vpop.f32.mrb[0].mxu0
        %v1315 = vadd.f32 %v1163, %v1314
        %v1316 = vpop.f32.mrb[0].mxu0
        %1317 = vmatprep.mubr.f32.mxu0 0.0
        %1318 = vmatmul.mubr.f32.gmra.mrb[0].mxu0 %v1192
        %v1319 = vpop.f32.mrb[0].mxu0
        %v1320 = vadd.f32 %v1164, %v1319
        %v1321 = vpop.f32.mrb[0].mxu0
        %1322 = vmatprep.mubr.f32.mxu0 0.0
        %1323 = vmatmul.mubr.f32.gmra.mrb[0].mxu0 %v1195
        %v1324 = vpop.f32.mrb[0].mxu0
        %v1325 = vadd.f32 %v1165, %v1324
        %v1326 = vpop.f32.mrb[0].mxu0
        %1327 = vmatprep.mubr.f32.mxu0 0.0
        %1328 = vmatmul.mubr.f32.gmra.mrb[0].mxu0 %v1198
        %v1329 = vpop.f32.mrb[0].mxu0
        %v1330 = vadd.f32 %v1166, %v1329
        %v1331 = vpop.f32.mrb[0].mxu0
        %1332 = vmatprep.mubr.f32.mxu0 0.0
        %1333 = vmatmul.mubr.f32.gmra.mrb[0].mxu0 %v1201
        %v1334 = vpop.f32.mrb[0].mxu0
        %v1335 = vadd.f32 %v1167, %v1334
        %v1336 = vpop.f32.mrb[0].mxu0
        %1337 = vmatprep.mubr.f32.mxu0 0.0
        %1338 = vmatmul.mubr.f32.gmra.mrb[0].mxu0 %v1204
        %v1339 = vpop.f32.mrb[0].mxu0
        %v1340 = vadd.f32 %v1168, %v1339
        %v1341 = vpop.f32.mrb[0].mxu0
        %1342 = vmatprep.mubr.f32.mxu0 0.0
        %1343 = vmatmul.mubr.f32.gmra.mrb[0].mxu0 %v1207
        %v1344 = vpop.f32.mrb[0].mxu0
        %v1345 = vadd.f32 %v1169, %v1344
        %v1346 = vpop.f32.mrb[0].mxu0
        %1347 = vmatprep.mubr.f32.mxu0 0.0
        %1348 = vmatmul.mubr.f32.gmra.mrb[0].mxu0 %v1210
        %v1349 = vpop.f32.mrb[0].mxu0
        %v1350 = vadd.f32 %v1170, %v1349
        %v1351 = vpop.f32.mrb[0].mxu0
        %1352 = vmatprep.mubr.f32.mxu0 0.0
        %1353 = vmatmul.mubr.f32.gmra.mrb[0].mxu0 %v1213
        %v1354 = vpop.f32.mrb[0].mxu0
        %v1355 = vadd.f32 %v1171, %v1354
        %v1356 = vpop.f32.mrb[0].mxu0
        %1357 = vmatprep.mubr.f32.mxu0 0.0
        %1358 = vmatmul.mubr.f32.gmra.mrb[0].mxu0 %v1216
        %v1359 = vpop.f32.mrb[0].mxu0
        %v1360 = vadd.f32 %v1172, %v1359
        %v1361 = vpop.f32.mrb[0].mxu0
        %1362 = vmatprep.mubr.f32.mxu0 0.0
        %1363 = vmatmul.mubr.f32.gmra.mrb[0].mxu0 %v1219
        %v1364 = vpop.f32.mrb[0].mxu0
        %v1365 = vadd.f32 %v1173, %v1364
        %v1366 = vpop.f32.mrb[0].mxu0
        %1367 = vmatprep.mubr.f32.mxu0 0.0
        %1368 = vmatmul.mubr.f32.gmra.mrb[0].mxu0 %v1222
        %v1369 = vpop.f32.mrb[0].mxu0
        %v1370 = vadd.f32 %v1174, %v1369
        %v1371 = vpop.f32.mrb[0].mxu0
        %1372 = vdwg.mxu0
        %v1373 = vsel %vm289, %v1295, 0.0
        %v1374 = vsel %vm289, %v1300, 0.0
        %v1375 = vadd.f32 %v1373, %v1374
        %v1376 = vsel %vm289, %v1305, 0.0
        %v1377 = vadd.f32 %v1375, %v1376
        %v1378 = vsel %vm289, %v1310, 0.0
        %v1379 = vadd.f32 %v1377, %v1378
        %v1380 = vsel %vm289, %v1315, 0.0
        %v1381 = vadd.f32 %v1379, %v1380
        %v1382 = vsel %vm289, %v1320, 0.0
        %v1383 = vadd.f32 %v1381, %v1382
        %v1384 = vsel %vm289, %v1325, 0.0
        %v1385 = vadd.f32 %v1383, %v1384
        %v1386 = vsel %vm289, %v1330, 0.0
        %v1387 = vadd.f32 %v1385, %v1386
        %v1388 = vsel %vm289, %v1335, 0.0
        %v1389 = vadd.f32 %v1387, %v1388
        %v1390 = vsel %vm289, %v1340, 0.0
        %v1391 = vadd.f32 %v1389, %v1390
        %v1392 = vsel %vm289, %v1345, 0.0
        %v1393 = vadd.f32 %v1391, %v1392
        %v1394 = vsel %vm289, %v1350, 0.0
        %v1395 = vadd.f32 %v1393, %v1394
        %v1396 = vsel %vm289, %v1355, 0.0
        %v1397 = vadd.f32 %v1395, %v1396
        %v1398 = vsel %vm289, %v1360, 0.0
        %v1399 = vadd.f32 %v1397, %v1398
        %v1400 = vsel %vm289, %v1365, 0.0
        %v1401 = vadd.f32 %v1399, %v1400
        %v1402 = vsel %vm289, %v1370, 0.0
        %v1403 = vadd.f32 %v1401, %v1402
        %v1404 = vrot.slane %v1403, 4
        %v1405 = vadd.f32 %v1403, %v1404
        %v1406 = vrot.slane %v1405, 2
        %v1407 = vadd.f32 %v1405, %v1406
        %v1408 = vrot.slane %v1407, 1
        %v1409 = vadd.f32 %v1407, %v1408
        %v1410 = vmul.f32 %v1409, 0.0078125
        %v1411 = vsub.f32 %v1295, %v1410
        %v1412 = vsub.f32 %v1300, %v1410
        %v1413 = vsub.f32 %v1305, %v1410
        %v1414 = vsub.f32 %v1310, %v1410
        %v1415 = vsub.f32 %v1315, %v1410
        %v1416 = vsub.f32 %v1320, %v1410
        %v1417 = vsub.f32 %v1325, %v1410
        %v1418 = vsub.f32 %v1330, %v1410
        %v1419 = vsub.f32 %v1335, %v1410
        %v1420 = vsub.f32 %v1340, %v1410
        %v1421 = vsub.f32 %v1345, %v1410
        %v1422 = vsub.f32 %v1350, %v1410
        %v1423 = vsub.f32 %v1355, %v1410
        %v1424 = vsub.f32 %v1360, %v1410
        %v1425 = vsub.f32 %v1365, %v1410
        %v1426 = vsub.f32 %v1370, %v1410
        %v1427 = vmul.f32 %v1411, %v1411
        %v1428 = vmul.f32 %v1412, %v1412
        %v1429 = vmul.f32 %v1413, %v1413
        %v1430 = vmul.f32 %v1414, %v1414
        %v1431 = vmul.f32 %v1415, %v1415
        %v1432 = vmul.f32 %v1416, %v1416
        %v1433 = vmul.f32 %v1417, %v1417
        %v1434 = vmul.f32 %v1418, %v1418
        %v1435 = vmul.f32 %v1419, %v1419
        %v1436 = vmul.f32 %v1420, %v1420
        %v1437 = vmul.f32 %v1421, %v1421
        %v1438 = vmul.f32 %v1422, %v1422
        %v1439 = vmul.f32 %v1423, %v1423
        %v1440 = vmul.f32 %v1424, %v1424
        %v1441 = vmul.f32 %v1425, %v1425
        %v1442 = vmul.f32 %v1426, %v1426
        %v1443 = vsel %vm289, %v1427, 0.0
        %v1444 = vsel %vm289, %v1428, 0.0
        %v1445 = vadd.f32 %v1443, %v1444
        %v1446 = vsel %vm289, %v1429, 0.0
        %v1447 = vadd.f32 %v1445, %v1446
        %v1448 = vsel %vm289, %v1430, 0.0
        %v1449 = vadd.f32 %v1447, %v1448
        %v1450 = vsel %vm289, %v1431, 0.0
        %v1451 = vadd.f32 %v1449, %v1450
        %v1452 = vsel %vm289, %v1432, 0.0
        %v1453 = vadd.f32 %v1451, %v1452
        %v1454 = vsel %vm289, %v1433, 0.0
        %v1455 = vadd.f32 %v1453, %v1454
        %v1456 = vsel %vm289, %v1434, 0.0
        %v1457 = vadd.f32 %v1455, %v1456
        %v1458 = vsel %vm289, %v1435, 0.0
        %v1459 = vadd.f32 %v1457, %v1458
        %v1460 = vsel %vm289, %v1436, 0.0
        %v1461 = vadd.f32 %v1459, %v1460
        %v1462 = vsel %vm289, %v1437, 0.0
        %v1463 = vadd.f32 %v1461, %v1462
        %v1464 = vsel %vm289, %v1438, 0.0
        %v1465 = vadd.f32 %v1463, %v1464
        %v1466 = vsel %vm289, %v1439, 0.0
        %v1467 = vadd.f32 %v1465, %v1466
        %v1468 = vsel %vm289, %v1440, 0.0
        %v1469 = vadd.f32 %v1467, %v1468
        %v1470 = vsel %vm289, %v1441, 0.0
        %v1471 = vadd.f32 %v1469, %v1470
        %v1472 = vsel %vm289, %v1442, 0.0
        %v1473 = vadd.f32 %v1471, %v1472
        %v1474 = vrot.slane %v1473, 4
        %v1475 = vadd.f32 %v1473, %v1474
        %v1476 = vrot.slane %v1475, 2
        %v1477 = vadd.f32 %v1475, %v1476
        %v1478 = vrot.slane %v1477, 1
        %v1479 = vadd.f32 %v1477, %v1478
        %vm1480 = vcmask 24576
        %1481 = vst.msk [vmem:[%s232] sm:$0x1] %vm1480, %v1409
        %1482 = vst.msk [vmem:[%s232 + $0x1] sm:$0x1] %vm1480, %v1479
        %s1483 = sand.u32 %s120, 1
        %s1484 = scalar_lea.sflag [#allocation5], %s1483
        %s1485 = sand.u32 %s120, 1
        %s1486 = smul.addr %s1485, 2
        %s1487 = scalar_lea.vmem [#allocation4], %s1486
        // Predicated region
        $region33: #{tpu_custom_call.1} parent=31 // pred_check
          %p1488 = pneg %p130
        $region34: #{tpu_custom_call.1} parent=31 // pred_check_branch
          %1490 = sbr.rel (%p1488) target = $region36
        $region35: #{tpu_custom_call.1} parent=31 // pred_region
          %s1491 = smul.u32 %s21, 2
          %s1492 = sadd.s32 %s1491, %s22
          %s1494 = ssub.s32 32, 32
          %1495 = vsyncadd %s1484, %s1494
          %s1496 = smul.addr %s1492, 32
          %s1497 = scalar_lea.hbm %s3, %s1496
          %s1499 = sshll.u32 %s1487, 4
          %s1500 = int_to_ptr.vmem [resolvable:$true] %s1499
          %1502 = dma.vmem_to_hbm [thread:$0]  %s1500, 32, %s1497, %s1484
        $region36: #{tpu_custom_call.1} parent=31 // pred_fallthru
          _
      $region32: #{tpu_custom_call.1} parent=5 // pred_fallthru
        _
      %p1503 = scmp.le.s32.totalorder 2, %s12
      // Predicated region
      $region37: #{tpu_custom_call.1} parent=5 // pred_check
        %p1504 = pneg %p1503
      $region38: #{tpu_custom_call.1} parent=5 // pred_check_branch
        %1506 = sbr.rel (%p1504) target = $region40
      $region39: #{tpu_custom_call.1} parent=5 // pred_region
        %s1507 = ssub.s32 %s12, 2
        // Predicated region
        $region41: #{tpu_custom_call.1} parent=39 // pred_check
          %p1508 = pneg %p136
        $region42: #{tpu_custom_call.1} parent=39 // pred_check_branch
          %1510 = sbr.rel (%p1508) target = $region44
        $region43: #{tpu_custom_call.1} parent=39 // pred_region
          %s1511 = sand.u32 %s121, 1
          %s1512 = scalar_lea.sflag [#allocation5], %s1511
          %s1513 = sand.u32 %s121, 1
          %s1514 = smul.addr %s1513, 2
          %s1515 = scalar_lea.vmem [#allocation4], %s1514
          %1516 = dma.done %s1512, 32
        $region44: #{tpu_custom_call.1} parent=39 // pred_fallthru
          _
      $region40: #{tpu_custom_call.1} parent=5 // pred_fallthru
        _
    $region6: #{tpu_custom_call.1} parent=1 // loop_footer
      %s16 = sadd.s32 1, %s12
    $region7: #{tpu_custom_call.1} parent=1 // loop_footer_branch
      %11 = sbr.rel target = $region3
    $region8: #{tpu_custom_call.1} parent=1 // loop_exit
      _
    %1517 = vsyncpa [#allocation5], 1
    %s1518 = scalar_lea.sflag [#allocation5], 1
    %1519 = vsyncpa %s1518, 1

</llo_original>
